<compile_context>
chip_gen: v7x
topology: tpu7x:2x2x1
jax: 0.10.0
libtpu: 0.0.40
codegen_flags: <defaults>
</compile_context>

<pallas_src>
import functools

import jax
import jax.numpy as jnp
from jax.experimental import pallas as pl
from jax.experimental.pallas import tpu as pltpu


def _fused_mha_kernel(xq_ref, xkv_ref, wq_ref, wkv_ref, wp_ref, b_ref, o_ref, *,
                      num_heads, head_size, scale, q_tile):
    # xq_ref:  (1, TQ, C)   query-row tile of x
    # xkv_ref: (1, T,  C)   full sequence (for K/V)
    # wq_ref:  (C, C)       all heads' query weights, stacked on lanes
    # wkv_ref: (C, 2C)      all heads' key|value weights, stacked on lanes
    # wp_ref:  (C, C)       output projection weight
    # b_ref:   (1, C)       output projection bias
    # o_ref:   (1, TQ, C)
    qi = pl.program_id(1)

    xq = xq_ref[0]                       # (TQ, C) native dtype
    xkv = xkv_ref[0]                     # (T, C)  native dtype
    in_dtype = xq.dtype

    # Fused, lane-dense projections for all heads at once (f32 accumulation).
    q = jnp.dot(xq, wq_ref[...], preferred_element_type=jnp.float32)    # (TQ, C)
    q = q * scale                        # scale the small (TQ, C) tensor, not (TQ, T)
    kv = jnp.dot(xkv, wkv_ref[...], preferred_element_type=jnp.float32)  # (T, 2C)

    TQ, C = q.shape
    T = kv.shape[0]
    k_all = kv[:, :C]                    # (T, C) f32
    v_all = kv[:, C:].astype(in_dtype)   # (T, C) native dtype for the p@v matmul

    # Causal mask for this query-row tile.
    row = qi * q_tile + jax.lax.broadcasted_iota(jnp.int32, (TQ, T), 0)
    col = jax.lax.broadcasted_iota(jnp.int32, (TQ, T), 1)
    causal = row >= col

    head_outs = []
    for h in range(num_heads):           # static unroll; num_heads is small
        sl = slice(h * head_size, (h + 1) * head_size)
        qh = q[:, sl]                    # (TQ, H) f32
        kh = k_all[:, sl]                # (T,  H) f32
        vh = v_all[:, sl]                # (T,  H) native dtype

        # scores = qh @ kh^T without materializing a transpose.
        s = jax.lax.dot_general(qh, kh, (((1,), (1,)), ((), ())),
                                preferred_element_type=jnp.float32)      # (TQ, T)
        s = jnp.where(causal, s, -jnp.inf)

        # Numerically-stable softmax; denominator via EUP reciprocal.
        m = jnp.max(s, axis=-1, keepdims=True)
        e = jnp.exp(s - m)
        denom = jnp.sum(e, axis=-1, keepdims=True)
        r = pl.reciprocal(denom, approx=True)
        r = r * (2.0 - denom * r)        # one Newton step -> ~f32 accuracy
        p = (e * r).astype(in_dtype)

        head_outs.append(jnp.dot(p, vh, preferred_element_type=jnp.float32))  # (TQ, H)

    heads = jnp.concatenate(head_outs, axis=-1)                          # (TQ, C) f32

    # Fused output projection; lane-dense (TQ, C) store.
    y = jnp.dot(heads.astype(in_dtype), wp_ref[...],
                preferred_element_type=jnp.float32)
    y = y + b_ref[...].astype(jnp.float32)
    o_ref[0] = y.astype(o_ref.dtype)


def multihead_attention(x, wq, wk, wv, w_proj, b_proj, *, q_tile=None):
    """x: (B, T, C); wq/wk/wv: (num_heads, C, H); w_proj: (C, C); b_proj: (C,)."""
    B, T, C = x.shape
    num_heads, _, H = wq.shape
    assert num_heads * H == C, "num_heads * head_size must equal n_embd"
    scale = float(C) ** (-0.5)           # matches the PyTorch reference (C = n_embd)

    if q_tile is None:
        q_tile = T if T <= 256 else 256  # smaller tiles keep v7x VMEM happy
    assert T % q_tile == 0, "T must be a multiple of the query tile"
    num_q_tiles = T // q_tile

    # Stack per-head weights lane-dense: (C, num_heads*H) = (C, C).
    def to2d(w):
        return jnp.transpose(w, (1, 0, 2)).reshape(C, num_heads * H)

    wq_all = to2d(wq)                                          # (C, C)
    wkv_all = jnp.concatenate([to2d(wk), to2d(wv)], axis=1)    # (C, 2C)
    b2d = b_proj.reshape(1, C)

    itemsize = jnp.dtype(x.dtype).itemsize
    flops = B * num_q_tiles * (
        2 * q_tile * C * C          # q projection
        + 4 * T * C * C             # k,v projection
        + 4 * q_tile * T * C        # scores + p@v over all heads
        + 2 * q_tile * C * C        # output projection
    )
    transcendentals = B * num_q_tiles * num_heads * q_tile * T
    bytes_accessed = itemsize * (
        B * num_q_tiles * (q_tile * C + T * C + 4 * C * C + C)  # inputs per step
        + B * T * C                                             # output
    )
    cost = pl.CostEstimate(flops=int(flops),
                           transcendentals=int(transcendentals),
                           bytes_accessed=int(bytes_accessed))

    kernel = functools.partial(
        _fused_mha_kernel,
        num_heads=num_heads, head_size=H, scale=scale, q_tile=q_tile)

    return pl.pallas_call(
        kernel,
        out_shape=jax.ShapeDtypeStruct((B, T, C), x.dtype),
        grid=(B, num_q_tiles),
        in_specs=[
            pl.BlockSpec((1, q_tile, C), lambda b, qi: (b, qi, 0)),  # query rows
            pl.BlockSpec((1, T, C), lambda b, qi: (b, 0, 0)),        # full seq for K/V
            pl.BlockSpec((C, C), lambda b, qi: (0, 0)),              # Wq (all heads)
            pl.BlockSpec((C, 2 * C), lambda b, qi: (0, 0)),          # Wk|Wv (all heads)
            pl.BlockSpec((C, C), lambda b, qi: (0, 0)),              # W_proj
            pl.BlockSpec((1, C), lambda b, qi: (0, 0)),              # b_proj
        ],
        out_specs=pl.BlockSpec((1, q_tile, C), lambda b, qi: (b, qi, 0)),
        compiler_params=pltpu.CompilerParams(
            dimension_semantics=("parallel", "parallel")),
        cost_estimate=cost,
    )(x, x, wq_all, wkv_all, w_proj, b2d)


def reference_multihead(x, wq, wk, wv, w_proj, b_proj):
    """Pure-JAX reference mirroring the PyTorch forward (dropout=None)."""
    B, T, C = x.shape
    num_heads = wq.shape[0]
    scale = float(C) ** (-0.5)
    outs = []
    for h in range(num_heads):
        q = x @ wq[h]
        k = x @ wk[h]
        v = x @ wv[h]
        wei = (q @ jnp.swapaxes(k, -2, -1)) * scale
        tril = jnp.tril(jnp.ones((T, T)))
        wei = jnp.where(tril == 0.0, -jnp.inf, wei)
        wei = jax.nn.softmax(wei, axis=-1)
        outs.append(wei @ v)
    out = jnp.concatenate(outs, axis=-1)
    return out @ w_proj + b_proj


if __name__ == "__main__":
    # Small shapes consistent with the module.
    B, T = 2, 8               # batch, sequence length (<= block_size)
    n_embd = 32
    num_heads = 4
    head_size = n_embd // num_heads

    key = jax.random.PRNGKey(0)
    kx, kq, kk, kv, kp, kb = jax.random.split(key, 6)

    x = jax.random.normal(kx, (B, T, n_embd), dtype=jnp.float32)
    wq = jax.random.normal(kq, (num_heads, n_embd, head_size), jnp.float32) * 0.1
    wk = jax.random.normal(kk, (num_heads, n_embd, head_size), jnp.float32) * 0.1
    wv = jax.random.normal(kv, (num_heads, n_embd, head_size), jnp.float32) * 0.1
    w_proj = jax.random.normal(kp, (n_embd, n_embd), jnp.float32) * 0.1
    b_proj = jax.random.normal(kb, (n_embd,), jnp.float32) * 0.1

    out = multihead_attention(x, wq, wk, wv, w_proj, b_proj)
    out = jax.block_until_ready(out)

    ref = reference_multihead(x, wq, wk, wv, w_proj, b_proj)
    assert out.shape == (B, T, n_embd)
    # Tolerance slightly looser than 1e-4 to cover the Newton-refined
    # approximate reciprocal in the softmax denominator.
    assert jnp.allclose(out, ref, atol=1e-3, rtol=1e-3), "mismatch vs reference"

    print("KERNEL_OK")
</pallas_src>

<mosaic_0001>
module attributes {stable_mosaic.version = 11 : i64} {
  func.func @_fused_mha_kernel(%arg0: i32, %arg1: i32, %arg2: memref<1x8x32xf32, #tpu.memory_space<vmem>>, %arg3: memref<1x8x32xf32, #tpu.memory_space<vmem>>, %arg4: memref<32x32xf32, #tpu.memory_space<vmem>>, %arg5: memref<32x64xf32, #tpu.memory_space<vmem>>, %arg6: memref<32x32xf32, #tpu.memory_space<vmem>>, %arg7: memref<1x32xf32, #tpu.memory_space<vmem>>, %arg8: memref<1x8x32xf32, #tpu.memory_space<vmem>>) attributes {dimension_semantics = [#tpu.dimension_semantics<parallel>, #tpu.dimension_semantics<parallel>], iteration_bounds = array<i64: 2, 1>, scalar_prefetch = 0 : i64, scratch_operands = 0 : i64, tpu.core_type = #tpu.core_type<tc>, window_params = [{transform_indices = @transform_0, window_bounds = array<i64: 1, 8, 32>}, {transform_indices = @transform_1, window_bounds = array<i64: 1, 8, 32>}, {pipeline_mode = #tpu.pipeline_mode<synchronous>, transform_indices = @transform_2, window_bounds = array<i64: 32, 32>}, {pipeline_mode = #tpu.pipeline_mode<synchronous>, transform_indices = @transform_3, window_bounds = array<i64: 32, 64>}, {pipeline_mode = #tpu.pipeline_mode<synchronous>, transform_indices = @transform_4, window_bounds = array<i64: 32, 32>}, {pipeline_mode = #tpu.pipeline_mode<synchronous>, transform_indices = @transform_5, window_bounds = array<i64: 1, 32>}, {transform_indices = @transform_6, window_bounds = array<i64: 1, 8, 32>}]} {
    %c0 = arith.constant 0 : index
    %c0_0 = arith.constant 0 : index
    %c0_1 = arith.constant 0 : index
    %0 = vector.load %arg2[%c0, %c0_0, %c0_1] : memref<1x8x32xf32, #tpu.memory_space<vmem>>, vector<1x8x32xf32>
    %1 = vector.shape_cast %0 : vector<1x8x32xf32> to vector<8x32xf32>
    %c0_2 = arith.constant 0 : index
    %c0_3 = arith.constant 0 : index
    %c0_4 = arith.constant 0 : index
    %2 = vector.load %arg3[%c0_2, %c0_3, %c0_4] : memref<1x8x32xf32, #tpu.memory_space<vmem>>, vector<1x8x32xf32>
    %3 = vector.shape_cast %2 : vector<1x8x32xf32> to vector<8x32xf32>
    %c0_5 = arith.constant 0 : index
    %c0_6 = arith.constant 0 : index
    %4 = vector.load %arg4[%c0_5, %c0_6] : memref<32x32xf32, #tpu.memory_space<vmem>>, vector<32x32xf32>
    %cst = arith.constant dense<0.000000e+00> : vector<8x32xf32>
    %5 = tpu.matmul %1, %4, %cst {dimension_numbers = #tpu.dot_dimension_numbers<[1], [0], [0], [1], [0, 0, 1, 1], [], []>} : vector<8x32xf32>, vector<32x32xf32>, vector<8x32xf32> -> vector<8x32xf32>
    %cst_7 = arith.constant 0.176776692 : f32
    %6 = vector.broadcast %cst_7 : f32 to vector<8x32xf32>
    %7 = arith.mulf %5, %6 : vector<8x32xf32>
    %c0_8 = arith.constant 0 : index
    %c0_9 = arith.constant 0 : index
    %8 = vector.load %arg5[%c0_8, %c0_9] : memref<32x64xf32, #tpu.memory_space<vmem>>, vector<32x64xf32>
    %cst_10 = arith.constant dense<0.000000e+00> : vector<8x64xf32>
    %9 = tpu.matmul %3, %8, %cst_10 {dimension_numbers = #tpu.dot_dimension_numbers<[1], [0], [0], [1], [0, 0, 1, 1], [], []>} : vector<8x32xf32>, vector<32x64xf32>, vector<8x64xf32> -> vector<8x64xf32>
    %10 = vector.extract_strided_slice %9 {offsets = [0, 0], sizes = [8, 32], strides = [1, 1]} : vector<8x64xf32> to vector<8x32xf32>
    %11 = vector.extract_strided_slice %9 {offsets = [0, 32], sizes = [8, 32], strides = [1, 1]} : vector<8x64xf32> to vector<8x32xf32>
    %c8_i32 = arith.constant 8 : i32
    %12 = arith.muli %arg1, %c8_i32 : i32
    %13 = tpu.iota {dimensions = array<i32: 0>} : vector<8x8xi32>
    %14 = vector.broadcast %12 : i32 to vector<8x8xi32>
    %15 = arith.addi %14, %13 : vector<8x8xi32>
    %16 = tpu.iota {dimensions = array<i32: 1>} : vector<8x8xi32>
    %17 = arith.cmpi sge, %15, %16 : vector<8x8xi32>
    %18 = vector.extract_strided_slice %7 {offsets = [0, 0], sizes = [8, 8], strides = [1, 1]} : vector<8x32xf32> to vector<8x8xf32>
    %19 = vector.extract_strided_slice %10 {offsets = [0, 0], sizes = [8, 8], strides = [1, 1]} : vector<8x32xf32> to vector<8x8xf32>
    %20 = vector.extract_strided_slice %11 {offsets = [0, 0], sizes = [8, 8], strides = [1, 1]} : vector<8x32xf32> to vector<8x8xf32>
    %cst_11 = arith.constant dense<0.000000e+00> : vector<8x8xf32>
    %21 = tpu.matmul %18, %19, %cst_11 {dimension_numbers = #tpu.dot_dimension_numbers<[1], [1], [0], [0], [0, 0, 1, 0], [], []>} : vector<8x8xf32>, vector<8x8xf32>, vector<8x8xf32> -> vector<8x8xf32>
    %cst_12 = arith.constant 0xFF800000 : f32
    %22 = vector.broadcast %cst_12 : f32 to vector<8x8xf32>
    %23 = arith.select %17, %21, %22 : vector<8x8xi1>, vector<8x8xf32>
    %cst_13 = arith.constant dense<0xFF800000> : vector<8xf32>
    %24 = vector.multi_reduction <maximumf>, %23, %cst_13 [1] : vector<8x8xf32> to vector<8xf32>
    %25 = vector.shape_cast %24 : vector<8xf32> to vector<8x1xf32>
    %26 = vector.broadcast %25 : vector<8x1xf32> to vector<8x8xf32>
    %27 = arith.subf %23, %26 : vector<8x8xf32>
    %28 = math.exp %27 : vector<8x8xf32>
    %cst_14 = arith.constant dense<0.000000e+00> : vector<8xf32>
    %29 = vector.multi_reduction <add>, %28, %cst_14 [1] : vector<8x8xf32> to vector<8xf32>
    %30 = vector.shape_cast %29 : vector<8xf32> to vector<8x1xf32>
    %31 = tpu.reciprocal %30 {approx = true} : vector<8x1xf32> -> vector<8x1xf32>
    %32 = arith.mulf %30, %31 : vector<8x1xf32>
    %cst_15 = arith.constant 2.000000e+00 : f32
    %33 = vector.broadcast %cst_15 : f32 to vector<8x1xf32>
    %34 = arith.subf %33, %32 : vector<8x1xf32>
    %35 = arith.mulf %31, %34 : vector<8x1xf32>
    %36 = vector.broadcast %35 : vector<8x1xf32> to vector<8x8xf32>
    %37 = arith.mulf %28, %36 : vector<8x8xf32>
    %cst_16 = arith.constant dense<0.000000e+00> : vector<8x8xf32>
    %38 = tpu.matmul %37, %20, %cst_16 {dimension_numbers = #tpu.dot_dimension_numbers<[1], [0], [0], [1], [0, 0, 1, 1], [], []>} : vector<8x8xf32>, vector<8x8xf32>, vector<8x8xf32> -> vector<8x8xf32>
    %39 = vector.extract_strided_slice %7 {offsets = [0, 8], sizes = [8, 8], strides = [1, 1]} : vector<8x32xf32> to vector<8x8xf32>
    %40 = vector.extract_strided_slice %10 {offsets = [0, 8], sizes = [8, 8], strides = [1, 1]} : vector<8x32xf32> to vector<8x8xf32>
    %41 = vector.extract_strided_slice %11 {offsets = [0, 8], sizes = [8, 8], strides = [1, 1]} : vector<8x32xf32> to vector<8x8xf32>
    %cst_17 = arith.constant dense<0.000000e+00> : vector<8x8xf32>
    %42 = tpu.matmul %39, %40, %cst_17 {dimension_numbers = #tpu.dot_dimension_numbers<[1], [1], [0], [0], [0, 0, 1, 0], [], []>} : vector<8x8xf32>, vector<8x8xf32>, vector<8x8xf32> -> vector<8x8xf32>
    %cst_18 = arith.constant 0xFF800000 : f32
    %43 = vector.broadcast %cst_18 : f32 to vector<8x8xf32>
    %44 = arith.select %17, %42, %43 : vector<8x8xi1>, vector<8x8xf32>
    %cst_19 = arith.constant dense<0xFF800000> : vector<8xf32>
    %45 = vector.multi_reduction <maximumf>, %44, %cst_19 [1] : vector<8x8xf32> to vector<8xf32>
    %46 = vector.shape_cast %45 : vector<8xf32> to vector<8x1xf32>
    %47 = vector.broadcast %46 : vector<8x1xf32> to vector<8x8xf32>
    %48 = arith.subf %44, %47 : vector<8x8xf32>
    %49 = math.exp %48 : vector<8x8xf32>
    %cst_20 = arith.constant dense<0.000000e+00> : vector<8xf32>
    %50 = vector.multi_reduction <add>, %49, %cst_20 [1] : vector<8x8xf32> to vector<8xf32>
    %51 = vector.shape_cast %50 : vector<8xf32> to vector<8x1xf32>
    %52 = tpu.reciprocal %51 {approx = true} : vector<8x1xf32> -> vector<8x1xf32>
    %53 = arith.mulf %51, %52 : vector<8x1xf32>
    %cst_21 = arith.constant 2.000000e+00 : f32
    %54 = vector.broadcast %cst_21 : f32 to vector<8x1xf32>
    %55 = arith.subf %54, %53 : vector<8x1xf32>
    %56 = arith.mulf %52, %55 : vector<8x1xf32>
    %57 = vector.broadcast %56 : vector<8x1xf32> to vector<8x8xf32>
    %58 = arith.mulf %49, %57 : vector<8x8xf32>
    %cst_22 = arith.constant dense<0.000000e+00> : vector<8x8xf32>
    %59 = tpu.matmul %58, %41, %cst_22 {dimension_numbers = #tpu.dot_dimension_numbers<[1], [0], [0], [1], [0, 0, 1, 1], [], []>} : vector<8x8xf32>, vector<8x8xf32>, vector<8x8xf32> -> vector<8x8xf32>
    %60 = vector.extract_strided_slice %7 {offsets = [0, 16], sizes = [8, 8], strides = [1, 1]} : vector<8x32xf32> to vector<8x8xf32>
    %61 = vector.extract_strided_slice %10 {offsets = [0, 16], sizes = [8, 8], strides = [1, 1]} : vector<8x32xf32> to vector<8x8xf32>
    %62 = vector.extract_strided_slice %11 {offsets = [0, 16], sizes = [8, 8], strides = [1, 1]} : vector<8x32xf32> to vector<8x8xf32>
    %cst_23 = arith.constant dense<0.000000e+00> : vector<8x8xf32>
    %63 = tpu.matmul %60, %61, %cst_23 {dimension_numbers = #tpu.dot_dimension_numbers<[1], [1], [0], [0], [0, 0, 1, 0], [], []>} : vector<8x8xf32>, vector<8x8xf32>, vector<8x8xf32> -> vector<8x8xf32>
    %cst_24 = arith.constant 0xFF800000 : f32
    %64 = vector.broadcast %cst_24 : f32 to vector<8x8xf32>
    %65 = arith.select %17, %63, %64 : vector<8x8xi1>, vector<8x8xf32>
    %cst_25 = arith.constant dense<0xFF800000> : vector<8xf32>
    %66 = vector.multi_reduction <maximumf>, %65, %cst_25 [1] : vector<8x8xf32> to vector<8xf32>
    %67 = vector.shape_cast %66 : vector<8xf32> to vector<8x1xf32>
    %68 = vector.broadcast %67 : vector<8x1xf32> to vector<8x8xf32>
    %69 = arith.subf %65, %68 : vector<8x8xf32>
    %70 = math.exp %69 : vector<8x8xf32>
    %cst_26 = arith.constant dense<0.000000e+00> : vector<8xf32>
    %71 = vector.multi_reduction <add>, %70, %cst_26 [1] : vector<8x8xf32> to vector<8xf32>
    %72 = vector.shape_cast %71 : vector<8xf32> to vector<8x1xf32>
    %73 = tpu.reciprocal %72 {approx = true} : vector<8x1xf32> -> vector<8x1xf32>
    %74 = arith.mulf %72, %73 : vector<8x1xf32>
    %cst_27 = arith.constant 2.000000e+00 : f32
    %75 = vector.broadcast %cst_27 : f32 to vector<8x1xf32>
    %76 = arith.subf %75, %74 : vector<8x1xf32>
    %77 = arith.mulf %73, %76 : vector<8x1xf32>
    %78 = vector.broadcast %77 : vector<8x1xf32> to vector<8x8xf32>
    %79 = arith.mulf %70, %78 : vector<8x8xf32>
    %cst_28 = arith.constant dense<0.000000e+00> : vector<8x8xf32>
    %80 = tpu.matmul %79, %62, %cst_28 {dimension_numbers = #tpu.dot_dimension_numbers<[1], [0], [0], [1], [0, 0, 1, 1], [], []>} : vector<8x8xf32>, vector<8x8xf32>, vector<8x8xf32> -> vector<8x8xf32>
    %81 = vector.extract_strided_slice %7 {offsets = [0, 24], sizes = [8, 8], strides = [1, 1]} : vector<8x32xf32> to vector<8x8xf32>
    %82 = vector.extract_strided_slice %10 {offsets = [0, 24], sizes = [8, 8], strides = [1, 1]} : vector<8x32xf32> to vector<8x8xf32>
    %83 = vector.extract_strided_slice %11 {offsets = [0, 24], sizes = [8, 8], strides = [1, 1]} : vector<8x32xf32> to vector<8x8xf32>
    %cst_29 = arith.constant dense<0.000000e+00> : vector<8x8xf32>
    %84 = tpu.matmul %81, %82, %cst_29 {dimension_numbers = #tpu.dot_dimension_numbers<[1], [1], [0], [0], [0, 0, 1, 0], [], []>} : vector<8x8xf32>, vector<8x8xf32>, vector<8x8xf32> -> vector<8x8xf32>
    %cst_30 = arith.constant 0xFF800000 : f32
    %85 = vector.broadcast %cst_30 : f32 to vector<8x8xf32>
    %86 = arith.select %17, %84, %85 : vector<8x8xi1>, vector<8x8xf32>
    %cst_31 = arith.constant dense<0xFF800000> : vector<8xf32>
    %87 = vector.multi_reduction <maximumf>, %86, %cst_31 [1] : vector<8x8xf32> to vector<8xf32>
    %88 = vector.shape_cast %87 : vector<8xf32> to vector<8x1xf32>
    %89 = vector.broadcast %88 : vector<8x1xf32> to vector<8x8xf32>
    %90 = arith.subf %86, %89 : vector<8x8xf32>
    %91 = math.exp %90 : vector<8x8xf32>
    %cst_32 = arith.constant dense<0.000000e+00> : vector<8xf32>
    %92 = vector.multi_reduction <add>, %91, %cst_32 [1] : vector<8x8xf32> to vector<8xf32>
    %93 = vector.shape_cast %92 : vector<8xf32> to vector<8x1xf32>
    %94 = tpu.reciprocal %93 {approx = true} : vector<8x1xf32> -> vector<8x1xf32>
    %95 = arith.mulf %93, %94 : vector<8x1xf32>
    %cst_33 = arith.constant 2.000000e+00 : f32
    %96 = vector.broadcast %cst_33 : f32 to vector<8x1xf32>
    %97 = arith.subf %96, %95 : vector<8x1xf32>
    %98 = arith.mulf %94, %97 : vector<8x1xf32>
    %99 = vector.broadcast %98 : vector<8x1xf32> to vector<8x8xf32>
    %100 = arith.mulf %91, %99 : vector<8x8xf32>
    %cst_34 = arith.constant dense<0.000000e+00> : vector<8x8xf32>
    %101 = tpu.matmul %100, %83, %cst_34 {dimension_numbers = #tpu.dot_dimension_numbers<[1], [0], [0], [1], [0, 0, 1, 1], [], []>} : vector<8x8xf32>, vector<8x8xf32>, vector<8x8xf32> -> vector<8x8xf32>
    %102 = tpu.concatenate %38, %59, %80, %101 in 1 : vector<8x8xf32>, vector<8x8xf32>, vector<8x8xf32>, vector<8x8xf32> -> vector<8x32xf32>
    %c0_35 = arith.constant 0 : index
    %c0_36 = arith.constant 0 : index
    %103 = vector.load %arg6[%c0_35, %c0_36] : memref<32x32xf32, #tpu.memory_space<vmem>>, vector<32x32xf32>
    %cst_37 = arith.constant dense<0.000000e+00> : vector<8x32xf32>
    %104 = tpu.matmul %102, %103, %cst_37 {dimension_numbers = #tpu.dot_dimension_numbers<[1], [0], [0], [1], [0, 0, 1, 1], [], []>} : vector<8x32xf32>, vector<32x32xf32>, vector<8x32xf32> -> vector<8x32xf32>
    %c0_38 = arith.constant 0 : index
    %c0_39 = arith.constant 0 : index
    %105 = vector.load %arg7[%c0_38, %c0_39] : memref<1x32xf32, #tpu.memory_space<vmem>>, vector<1x32xf32>
    %106 = vector.broadcast %105 : vector<1x32xf32> to vector<8x32xf32>
    %107 = arith.addf %104, %106 : vector<8x32xf32>
    %c0_40 = arith.constant 0 : index
    %c0_41 = arith.constant 0 : index
    %c0_42 = arith.constant 0 : index
    %108 = vector.load %arg8[%c0_40, %c0_41, %c0_42] : memref<1x8x32xf32, #tpu.memory_space<vmem>>, vector<1x8x32xf32>
    %109 = vector.shape_cast %108 : vector<1x8x32xf32> to vector<8x32xf32>
    %110 = vector.shape_cast %107 : vector<8x32xf32> to vector<1x8x32xf32>
    tpu.vector_store %arg8[%c0_40, %c0_41, %c0_42], %110 {strides = array<i32>} : memref<1x8x32xf32, #tpu.memory_space<vmem>>, vector<1x8x32xf32>,
    return
  }
  func.func @transform_0(%arg0: i32, %arg1: i32) -> (i32, i32, i32) {
    %c0_i32 = arith.constant 0 : i32
    %c0_i32_0 = arith.constant 0 : i32
    return %arg0, %arg1, %c0_i32 : i32, i32, i32
  }
  func.func @transform_1(%arg0: i32, %arg1: i32) -> (i32, i32, i32) {
    %c0_i32 = arith.constant 0 : i32
    %c0_i32_0 = arith.constant 0 : i32
    %c0_i32_1 = arith.constant 0 : i32
    return %arg0, %c0_i32, %c0_i32_0 : i32, i32, i32
  }
  func.func @transform_2(%arg0: i32, %arg1: i32) -> (i32, i32) {
    %c0_i32 = arith.constant 0 : i32
    %c0_i32_0 = arith.constant 0 : i32
    %c0_i32_1 = arith.constant 0 : i32
    return %c0_i32, %c0_i32_0 : i32, i32
  }
  func.func @transform_3(%arg0: i32, %arg1: i32) -> (i32, i32) {
    %c0_i32 = arith.constant 0 : i32
    %c0_i32_0 = arith.constant 0 : i32
    %c0_i32_1 = arith.constant 0 : i32
    return %c0_i32, %c0_i32_0 : i32, i32
  }
  func.func @transform_4(%arg0: i32, %arg1: i32) -> (i32, i32) {
    %c0_i32 = arith.constant 0 : i32
    %c0_i32_0 = arith.constant 0 : i32
    %c0_i32_1 = arith.constant 0 : i32
    return %c0_i32, %c0_i32_0 : i32, i32
  }
  func.func @transform_5(%arg0: i32, %arg1: i32) -> (i32, i32) {
    %c0_i32 = arith.constant 0 : i32
    %c0_i32_0 = arith.constant 0 : i32
    %c0_i32_1 = arith.constant 0 : i32
    return %c0_i32, %c0_i32_0 : i32, i32
  }
  func.func @transform_6(%arg0: i32, %arg1: i32) -> (i32, i32, i32) {
    %c0_i32 = arith.constant 0 : i32
    %c0_i32_0 = arith.constant 0 : i32
    return %arg0, %arg1, %c0_i32 : i32, i32, i32
  }
}

</mosaic_0001>

<llo_original>
// kernel: tpu_custom_call.1
$region0: #{tpu_custom_call.1}
  #allocation0 [shape = 'u32[]', space=smem, size = 0x4, offset = 0x4, fixed_abs, tag = 'smem constant byte address 0x4 - core index']
  #allocation1 [shape = 'u32[144,128]{1,0:T(1,128)}', space=vmem, size = 0x12000, scoped, tag = 'internal scratch']
  %s0 = inlined_call_operand.hbm [shape: f32[2,8,32], index: 0, kind: input, shape index: {}]
  %s1 = inlined_call_operand.hbm [shape: f32[2,8,32], index: 1, kind: input, shape index: {}]
  %s2 = inlined_call_operand.hbm [shape: f32[32,32], index: 2, kind: input, shape index: {}]
  %s3 = inlined_call_operand.hbm [shape: f32[32,64], index: 3, kind: input, shape index: {}]
  %s4 = inlined_call_operand.hbm [shape: f32[32,32], index: 4, kind: input, shape index: {}]
  %s5 = inlined_call_operand.vmem [shape: f32[1,32], index: 5, kind: input, shape index: {}]
  %s6 = inlined_call_operand.hbm [shape: f32[2,8,32], index: 6, kind: output, shape index: {}]
  %s7 = sld [smem:[#allocation0]]
  $region77: #{tpu_custom_call.1} parent=0
    _
  %s9 = ssub.s32 1, %s7
  %s10 = scalar_select 0, %s9, %s7
  $region1: #{tpu_custom_call.1} parent=0
    #allocation2 [shape = 'u8[8192]{0}', space=vmem, size = 0x2000, scoped, tag = 'input window, operand 0']
    #allocation3 [shape = 's32[2]{0}', space=sflag, size = 0x8, scoped, tag = 'scoped memory for tpu_custom_call.1']
    #allocation4 [shape = 's32[2]{0}', space=sflag, size = 0x8, scoped, tag = 'scoped memory for tpu_custom_call.1']
    #allocation5 [shape = 'u8[8192]{0}', space=vmem, size = 0x2000, scoped, tag = 'input window, operand 1']
    #allocation6 [shape = 's32[2]{0}', space=sflag, size = 0x8, scoped, tag = 'scoped memory for tpu_custom_call.1']
    #allocation7 [shape = 'u8[16384]{0}', space=vmem, size = 0x4000, scoped, tag = 'input window, operand 2, single buffered']
    #allocation8 [shape = 'u8[16384]{0}', space=vmem, size = 0x4000, scoped, tag = 'input window, operand 3, single buffered']
    #allocation9 [shape = 's32[1]{0}', space=sflag, size = 0x4, scoped, tag = 'scoped memory for tpu_custom_call.1']
    #allocation10 [shape = 'u8[16384]{0}', space=vmem, size = 0x4000, scoped, tag = 'input window, operand 4, single buffered']
    #allocation11 [shape = 'u8[8192]{0}', space=vmem, size = 0x2000, scoped, tag = 'output window, operand 0']
    %11 = vsyncpa [#allocation3], 0
    %s12 = scalar_lea.sflag [#allocation3], 1
    %13 = vsyncpa %s12, 0
    %14 = vsyncpa [#allocation6], 0
    %s15 = scalar_lea.sflag [#allocation6], 1
    %16 = vsyncpa %s15, 0
    %17 = vsyncpa [#allocation9], 0
    %18 = vsyncpa [#allocation4], 0
    %s19 = scalar_lea.sflag [#allocation4], 1
    %20 = vsyncpa %s19, 0
    loop: start=0, step=1, limit=4
    $region2: #{tpu_custom_call.1} parent=1 // loop_pre_header
      _
    $region3: #{tpu_custom_call.1} parent=1 // loop_header
      %s22 = sphi 0, %s26
      %p23 = scmp.ge.s32.totalorder %s22, 4
      %s29 = sphi 0, %s41
      %s30 = sphi 0, %s37
      %s31 = sphi 0, %s29
      %s32 = sphi 0, %s30
      %s33 = sphi 0, %s31
      %s34 = sphi 0, %s32
      %s46 = sphi 0, %s48
      %s49 = sphi 0, %s46
      %s50 = sphi 0, %s49
      %s66 = sphi 0, %s50
      %s72 = sphi 0, %s74
      %s75 = sphi 0, %s72
      %s76 = sphi 0, %s75
      %s92 = sphi 0, %s76
      %s96 = sphi 0, %s96
      %s98 = sphi 0, %s96
      %s99 = sphi 0, %s98
      %s113 = sphi 0, %s99
      %s117 = sphi 0, %s117
      %s119 = sphi 0, %s117
      %s120 = sphi 0, %s119
      %s134 = sphi 0, %s120
      %s138 = sphi 0, %s138
      %s140 = sphi 0, %s138
      %s141 = sphi 0, %s140
      %s155 = sphi 0, %s141
      %s159 = sphi 0, %s159
      %s161 = sphi 0, %s159
      %s162 = sphi 0, %s161
      %s176 = sphi 0, %s162
      %s184 = sphi 0, %s186
      %s187 = sphi 0, %s184
      %s188 = sphi 0, %s187
      %s204 = sphi 0, %s188
    $region4: #{tpu_custom_call.1} parent=1 // loop_header_branch
      %25 = sbr.rel (%p23) target = $region8
    $region5: #{tpu_custom_call.1} parent=1 // loop_body
      %s27 = ssub.s32 %s22, 1
      %s28 = ssub.s32 %s22, 2
      %s35 = sadd.s32 1, %s30
      %p36 = scmp.ge.s32.totalorder %s35, 1
      %s37 = scalar_select %p36, 0, %s35
      %s38 = sadd.s32 1, %s29
      %s39 = scalar_select %p36, %s38, %s29
      %p40 = scmp.ge.s32.totalorder %s39, 2
      %s41 = scalar_select %p40, 0, %s39
      %s42 = ssub.s32 %s29, %s41
      %s43 = ssub.s32 %s30, %s37
      %s44 = sor.u32 %s42, %s43
      %p45 = scmp.eq.s32.totalorder %s44, 0
      %s47 = sadd.s32 %s46, 1
      %s48 = scalar_select %p45, %s46, %s47
      %p51 = pneg %p45
      %p52 = scmp.eq.s32.totalorder %s22, 1
      %p53 = por %p51, %p52
      %p54 = scmp.ne.s32.totalorder %s46, %s49
      %p55 = scmp.eq.s32.totalorder %s22, 0
      %p56 = por %p54, %p55
      %p57 = scmp.ne.s32.totalorder %s46, %s49
      %p58 = scmp.eq.s32.totalorder %s27, 1
      %p59 = por %p57, %p58
      %p60 = scmp.ne.s32.totalorder %s49, %s50
      %p61 = scmp.eq.s32.totalorder %s27, 0
      %p62 = por %p60, %p61
      %p63 = scmp.ne.s32.totalorder %s49, %s50
      %p64 = scmp.eq.s32.totalorder %s28, 1
      %p65 = por %p63, %p64
      %p67 = scmp.ne.s32.totalorder %s50, %s66
      %p68 = scmp.eq.s32.totalorder %s28, 0
      %p69 = por %p67, %p68
      %s70 = ssub.s32 %s29, %s41
      %p71 = scmp.eq.s32.totalorder %s70, 0
      %s73 = sadd.s32 %s72, 1
      %s74 = scalar_select %p71, %s72, %s73
      %p77 = pneg %p71
      %p78 = scmp.eq.s32.totalorder %s22, 1
      %p79 = por %p77, %p78
      %p80 = scmp.ne.s32.totalorder %s72, %s75
      %p81 = scmp.eq.s32.totalorder %s22, 0
      %p82 = por %p80, %p81
      %p83 = scmp.ne.s32.totalorder %s72, %s75
      %p84 = scmp.eq.s32.totalorder %s27, 1
      %p85 = por %p83, %p84
      %p86 = scmp.ne.s32.totalorder %s75, %s76
      %p87 = scmp.eq.s32.totalorder %s27, 0
      %p88 = por %p86, %p87
      %p89 = scmp.ne.s32.totalorder %s75, %s76
      %p90 = scmp.eq.s32.totalorder %s28, 1
      %p91 = por %p89, %p90
      %p93 = scmp.ne.s32.totalorder %s76, %s92
      %p94 = scmp.eq.s32.totalorder %s28, 0
      %p95 = por %p93, %p94
      %s97 = sadd.s32 %s96, 1
      %p100 = scmp.eq.s32.totalorder %s22, 1
      %p101 = scmp.ne.s32.totalorder %s96, %s98
      %p102 = scmp.eq.s32.totalorder %s22, 0
      %p103 = por %p101, %p102
      %p104 = scmp.ne.s32.totalorder %s96, %s98
      %p105 = scmp.eq.s32.totalorder %s27, 1
      %p106 = por %p104, %p105
      %p107 = scmp.ne.s32.totalorder %s98, %s99
      %p108 = scmp.eq.s32.totalorder %s27, 0
      %p109 = por %p107, %p108
      %p110 = scmp.ne.s32.totalorder %s98, %s99
      %p111 = scmp.eq.s32.totalorder %s28, 1
      %p112 = por %p110, %p111
      %p114 = scmp.ne.s32.totalorder %s99, %s113
      %p115 = scmp.eq.s32.totalorder %s28, 0
      %p116 = por %p114, %p115
      %s118 = sadd.s32 %s117, 1
      %p121 = scmp.eq.s32.totalorder %s22, 1
      %p122 = scmp.ne.s32.totalorder %s117, %s119
      %p123 = scmp.eq.s32.totalorder %s22, 0
      %p124 = por %p122, %p123
      %p125 = scmp.ne.s32.totalorder %s117, %s119
      %p126 = scmp.eq.s32.totalorder %s27, 1
      %p127 = por %p125, %p126
      %p128 = scmp.ne.s32.totalorder %s119, %s120
      %p129 = scmp.eq.s32.totalorder %s27, 0
      %p130 = por %p128, %p129
      %p131 = scmp.ne.s32.totalorder %s119, %s120
      %p132 = scmp.eq.s32.totalorder %s28, 1
      %p133 = por %p131, %p132
      %p135 = scmp.ne.s32.totalorder %s120, %s134
      %p136 = scmp.eq.s32.totalorder %s28, 0
      %p137 = por %p135, %p136
      %s139 = sadd.s32 %s138, 1
      %p142 = scmp.eq.s32.totalorder %s22, 1
      %p143 = scmp.ne.s32.totalorder %s138, %s140
      %p144 = scmp.eq.s32.totalorder %s22, 0
      %p145 = por %p143, %p144
      %p146 = scmp.ne.s32.totalorder %s138, %s140
      %p147 = scmp.eq.s32.totalorder %s27, 1
      %p148 = por %p146, %p147
      %p149 = scmp.ne.s32.totalorder %s140, %s141
      %p150 = scmp.eq.s32.totalorder %s27, 0
      %p151 = por %p149, %p150
      %p152 = scmp.ne.s32.totalorder %s140, %s141
      %p153 = scmp.eq.s32.totalorder %s28, 1
      %p154 = por %p152, %p153
      %p156 = scmp.ne.s32.totalorder %s141, %s155
      %p157 = scmp.eq.s32.totalorder %s28, 0
      %p158 = por %p156, %p157
      %s160 = sadd.s32 %s159, 1
      %p163 = scmp.eq.s32.totalorder %s22, 1
      %p164 = scmp.ne.s32.totalorder %s159, %s161
      %p165 = scmp.eq.s32.totalorder %s22, 0
      %p166 = por %p164, %p165
      %p167 = scmp.ne.s32.totalorder %s159, %s161
      %p168 = scmp.eq.s32.totalorder %s27, 1
      %p169 = por %p167, %p168
      %p170 = scmp.ne.s32.totalorder %s161, %s162
      %p171 = scmp.eq.s32.totalorder %s27, 0
      %p172 = por %p170, %p171
      %p173 = scmp.ne.s32.totalorder %s161, %s162
      %p174 = scmp.eq.s32.totalorder %s28, 1
      %p175 = por %p173, %p174
      %p177 = scmp.ne.s32.totalorder %s162, %s176
      %p178 = scmp.eq.s32.totalorder %s28, 0
      %p179 = por %p177, %p178
      %s180 = ssub.s32 %s29, %s41
      %s181 = ssub.s32 %s30, %s37
      %s182 = sor.u32 %s180, %s181
      %p183 = scmp.eq.s32.totalorder %s182, 0
      %s185 = sadd.s32 %s184, 1
      %s186 = scalar_select %p183, %s184, %s185
      %p189 = pneg %p183
      %p190 = scmp.eq.s32.totalorder %s22, 1
      %p191 = por %p189, %p190
      %p192 = scmp.ne.s32.totalorder %s184, %s187
      %p193 = scmp.eq.s32.totalorder %s22, 0
      %p194 = por %p192, %p193
      %p195 = scmp.ne.s32.totalorder %s184, %s187
      %p196 = scmp.eq.s32.totalorder %s27, 1
      %p197 = por %p195, %p196
      %p198 = scmp.ne.s32.totalorder %s187, %s188
      %p199 = scmp.eq.s32.totalorder %s27, 0
      %p200 = por %p198, %p199
      %p201 = scmp.ne.s32.totalorder %s187, %s188
      %p202 = scmp.eq.s32.totalorder %s28, 1
      %p203 = por %p201, %p202
      %p205 = scmp.ne.s32.totalorder %s188, %s204
      %p206 = scmp.eq.s32.totalorder %s28, 0
      %p207 = por %p205, %p206
      %p208 = scmp.le.s32.totalorder 1, %s22
      %p209 = scmp.lt.s32.totalorder %s22, 3
      %p210 = pnand %p208, %p209
      %p211 = pneg %p210
      // Predicated region
      $region9: #{tpu_custom_call.1} parent=5 // pred_check
        _
      $region10: #{tpu_custom_call.1} parent=5 // pred_check_branch
        %213 = sbr.rel (%p210) target = $region12
      $region11: #{tpu_custom_call.1} parent=5 // pred_region
        %s214 = ssub.s32 %s22, 1
        // Predicated region
        $region13: #{tpu_custom_call.1} parent=11 // pred_check
          %p215 = pneg %p109
        $region14: #{tpu_custom_call.1} parent=11 // pred_check_branch
          %217 = sbr.rel (%p215) target = $region16
        $region15: #{tpu_custom_call.1} parent=11 // pred_region
          %s219 = ssub.s32 512, 512
          %220 = vsyncadd [#allocation6], %s219
          %s221 = sshll.u32 [#allocation7], 4
          %s222 = int_to_ptr.vmem [resolvable:$true] %s221
          %227 = dma.hbm_to_vmem [thread:$0]  %s2, 512, %s222, [#allocation6], 128, 128, 8
        $region16: #{tpu_custom_call.1} parent=11 // pred_fallthru
          _
        // Predicated region
        $region17: #{tpu_custom_call.1} parent=11 // pred_check
          %p228 = pneg %p130
        $region18: #{tpu_custom_call.1} parent=11 // pred_check_branch
          %230 = sbr.rel (%p228) target = $region20
        $region19: #{tpu_custom_call.1} parent=11 // pred_region
          %s232 = ssub.s32 512, 512
          %233 = vsyncadd [#allocation9], %s232
          %s234 = sshll.u32 [#allocation8], 4
          %s235 = int_to_ptr.vmem [resolvable:$true] %s234
          %240 = dma.hbm_to_vmem [thread:$0]  %s3, 512, %s235, [#allocation9], 128, 128, 8
        $region20: #{tpu_custom_call.1} parent=11 // pred_fallthru
          _
        // Predicated region
        $region21: #{tpu_custom_call.1} parent=11 // pred_check
          %p241 = pneg %p151
        $region22: #{tpu_custom_call.1} parent=11 // pred_check_branch
          %243 = sbr.rel (%p241) target = $region24
        $region23: #{tpu_custom_call.1} parent=11 // pred_region
          %s245 = ssub.s32 512, 512
          %246 = vsyncadd [#allocation9], %s245
          %s247 = sshll.u32 [#allocation10], 4
          %s248 = int_to_ptr.vmem [resolvable:$true] %s247
          %253 = dma.hbm_to_vmem [thread:$0]  %s4, 512, %s248, [#allocation9], 128, 128, 8
        $region24: #{tpu_custom_call.1} parent=11 // pred_fallthru
          _
        // Predicated region
        $region25: #{tpu_custom_call.1} parent=11 // pred_check
          %p254 = pneg %p172
        $region26: #{tpu_custom_call.1} parent=11 // pred_check_branch
          %256 = sbr.rel (%p254) target = $region28
        $region27: #{tpu_custom_call.1} parent=11 // pred_region
          _
        $region28: #{tpu_custom_call.1} parent=11 // pred_fallthru
          _
      $region12: #{tpu_custom_call.1} parent=5 // pred_fallthru
        _
      %p257 = scmp.lt.s32.totalorder %s22, 2
      // Predicated region
      $region29: #{tpu_custom_call.1} parent=5 // pred_check
        %p258 = pneg %p257
      $region30: #{tpu_custom_call.1} parent=5 // pred_check_branch
        %260 = sbr.rel (%p258) target = $region32
      $region31: #{tpu_custom_call.1} parent=5 // pred_region
        // Predicated region
        $region33: #{tpu_custom_call.1} parent=31 // pred_check
          %p261 = pneg %p56
        $region34: #{tpu_custom_call.1} parent=31 // pred_check_branch
          %263 = sbr.rel (%p261) target = $region36
        $region35: #{tpu_custom_call.1} parent=31 // pred_region
          %s264 = sand.u32 %s46, 1
          %s265 = scalar_lea.sflag [#allocation3], %s264
          %s266 = sand.u32 %s46, 1
          %s267 = smul.addr %s266, 8
          %s268 = scalar_lea.vmem [#allocation2], %s267
          %s270 = ssub.s32 128, 128
          %271 = vsyncadd %s265, %s270
          %s272 = sadd.s32 %s30, %s29
          %s273 = smul.addr %s272, 128
          %s274 = scalar_lea.hbm %s0, %s273
          %s276 = sshll.u32 %s268, 4
          %s277 = int_to_ptr.vmem [resolvable:$true] %s276
          %279 = dma.hbm_to_vmem [thread:$0]  %s274, 128, %s277, %s265
        $region36: #{tpu_custom_call.1} parent=31 // pred_fallthru
          _
        // Predicated region
        $region37: #{tpu_custom_call.1} parent=31 // pred_check
          %p280 = pneg %p82
        $region38: #{tpu_custom_call.1} parent=31 // pred_check_branch
          %282 = sbr.rel (%p280) target = $region40
        $region39: #{tpu_custom_call.1} parent=31 // pred_region
          %s283 = sand.u32 %s22, 1
          %s284 = scalar_lea.sflag [#allocation6], %s283
          %s285 = sand.u32 %s72, 1
          %s286 = smul.addr %s285, 8
          %s287 = scalar_lea.vmem [#allocation5], %s286
          %s289 = ssub.s32 128, 128
          %290 = vsyncadd %s284, %s289
          %s291 = smul.addr %s29, 128
          %s292 = scalar_lea.hbm %s1, %s291
          %s294 = sshll.u32 %s287, 4
          %s295 = int_to_ptr.vmem [resolvable:$true] %s294
          %297 = dma.hbm_to_vmem [thread:$0]  %s292, 128, %s295, %s284
        $region40: #{tpu_custom_call.1} parent=31 // pred_fallthru
          _
      $region32: #{tpu_custom_call.1} parent=5 // pred_fallthru
        _
      %p298 = scmp.le.s32.totalorder 1, %s22
      %p299 = scmp.lt.s32.totalorder %s22, 3
      %p300 = pnand %p298, %p299
      %p301 = pneg %p300
      // Predicated region
      $region41: #{tpu_custom_call.1} parent=5 // pred_check
        _
      $region42: #{tpu_custom_call.1} parent=5 // pred_check_branch
        %303 = sbr.rel (%p300) target = $region44
      $region43: #{tpu_custom_call.1} parent=5 // pred_region
        %s304 = ssub.s32 %s22, 1
        %s305 = sand.u32 %s49, 1
        %s306 = scalar_lea.sflag [#allocation3], %s305
        %s307 = sand.u32 %s49, 1
        %s308 = smul.addr %s307, 8
        %s309 = scalar_lea.vmem [#allocation2], %s308
        // Predicated region
        $region45: #{tpu_custom_call.1} parent=43 // pred_check
          %p310 = pneg %p62
        $region46: #{tpu_custom_call.1} parent=43 // pred_check_branch
          %312 = sbr.rel (%p310) target = $region48
        $region47: #{tpu_custom_call.1} parent=43 // pred_region
          %313 = dma.done %s306, 128
        $region48: #{tpu_custom_call.1} parent=43 // pred_fallthru
          _
        %s314 = sand.u32 %s27, 1
        %s315 = scalar_lea.sflag [#allocation6], %s314
        %s316 = sand.u32 %s75, 1
        %s317 = smul.addr %s316, 8
        %s318 = scalar_lea.vmem [#allocation5], %s317
        // Predicated region
        $region49: #{tpu_custom_call.1} parent=43 // pred_check
          %p319 = pneg %p88
        $region50: #{tpu_custom_call.1} parent=43 // pred_check_branch
          %321 = sbr.rel (%p319) target = $region52
        $region51: #{tpu_custom_call.1} parent=43 // pred_region
          %322 = dma.done %s315, 128
        $region52: #{tpu_custom_call.1} parent=43 // pred_fallthru
          _
        // Predicated region
        $region53: #{tpu_custom_call.1} parent=43 // pred_check
          %p323 = pneg %p109
        $region54: #{tpu_custom_call.1} parent=43 // pred_check_branch
          %325 = sbr.rel (%p323) target = $region56
        $region55: #{tpu_custom_call.1} parent=43 // pred_region
          %326 = dma.done [#allocation6], 512
        $region56: #{tpu_custom_call.1} parent=43 // pred_fallthru
          _
        // Predicated region
        $region57: #{tpu_custom_call.1} parent=43 // pred_check
          %p327 = pneg %p130
        $region58: #{tpu_custom_call.1} parent=43 // pred_check_branch
          %329 = sbr.rel (%p327) target = $region60
        $region59: #{tpu_custom_call.1} parent=43 // pred_region
          %330 = dma.done [#allocation9], 512
        $region60: #{tpu_custom_call.1} parent=43 // pred_fallthru
          _
        // Predicated region
        $region61: #{tpu_custom_call.1} parent=43 // pred_check
          %p331 = pneg %p151
        $region62: #{tpu_custom_call.1} parent=43 // pred_check_branch
          %333 = sbr.rel (%p331) target = $region64
        $region63: #{tpu_custom_call.1} parent=43 // pred_region
          %334 = dma.done [#allocation9], 512
        $region64: #{tpu_custom_call.1} parent=43 // pred_fallthru
          _
        %s335 = sand.u32 %s49, 1
        %s336 = scalar_lea.sflag [#allocation3], %s335
        %s337 = sand.u32 %s49, 1
        %s338 = smul.addr %s337, 8
        %s339 = scalar_lea.vmem [#allocation2], %s338
        %p340 = pneg %p62
        %p341 = pneg %p59
        %s342 = sand.u32 %s27, 1
        %s343 = scalar_lea.sflag [#allocation6], %s342
        %s344 = sand.u32 %s75, 1
        %s345 = smul.addr %s344, 8
        %s346 = scalar_lea.vmem [#allocation5], %s345
        %p347 = pneg %p88
        %p348 = pneg %p85
        %p349 = pneg %p109
        %p350 = pneg %p106
        %p351 = pneg %p130
        %p352 = pneg %p127
        %p353 = pneg %p151
        %p354 = pneg %p148
        %p355 = pneg %p172
        %p356 = pneg %p169
        %p357 = pneg %p200
        %p358 = pneg %p197
        %s359 = sand.u32 %s187, 1
        %s360 = scalar_lea.sflag [#allocation4], %s359
        %s361 = sand.u32 %s187, 1
        %s362 = smul.addr %s361, 8
        %s363 = scalar_lea.vmem [#allocation11], %s362
        %v364 = vld [vmem:[%s309] sm:$0xff]
        %v365 = vld [vmem:[%s318] sm:$0xff]
        %v366 = vld [vmem:[#allocation7] sm:$0xff]
        %v367 = vld [vmem:[#allocation7 + $0x8] sm:$0xff]
        %v368 = vld [vmem:[#allocation7 + $0x10] sm:$0xff]
        %v369 = vld [vmem:[#allocation7 + $0x18] sm:$0xff]
        %vm370 = vcmask 261120
        %v372 = vsel %vm370, %v364, 0
        %374 = vmatprep.subr.mxu0 0.0
        %375 = vmatpush1.msra.mxu0 %v366
        %376 = vmatprep.subr.mxu0 0.0
        %377 = vmatpush1.msra.mxu0 %v367
        %378 = vmatprep.subr.mxu0 0.0
        %379 = vmatpush1.msra.mxu0 %v368
        %380 = vmatprep.subr.mxu0 0.0
        %381 = vmatpush1.msra.mxu0 %v369
        %382 = vmatprep.subr.mxu0 0.0
        %383 = vmatpush1.msra.mxu0 0.0
        %384 = vmatprep.subr.mxu0 0.0
        %385 = vmatpush1.msra.mxu0 0.0
        %386 = vmatprep.subr.mxu0 0.0
        %387 = vmatpush1.msra.mxu0 0.0
        %388 = vmatprep.subr.mxu0 0.0
        %389 = vmatpush1.msra.mxu0 0.0
        %390 = vmatprep.subr.mxu0 0.0
        %391 = vmatpush1.msra.mxu0 0.0
        %392 = vmatprep.subr.mxu0 0.0
        %393 = vmatpush1.msra.mxu0 0.0
        %394 = vmatprep.subr.mxu0 0.0
        %395 = vmatpush1.msra.mxu0 0.0
        %396 = vmatprep.subr.mxu0 0.0
        %397 = vmatpush1.msra.mxu0 0.0
        %398 = vmatprep.subr.mxu0 0.0
        %399 = vmatpush1.msra.mxu0 0.0
        %400 = vmatprep.subr.mxu0 0.0
        %401 = vmatpush1.msra.mxu0 0.0
        %402 = vmatprep.subr.mxu0 0.0
        %403 = vmatpush1.msra.mxu0 0.0
        %404 = vmatprep.subr.mxu0 0.0
        %405 = vmatpush1.msra.mxu0 0.0
        %406 = vmatprep.subr.mxu0 0.0
        %407 = vmatpush1.msra.mxu0 0.0
        %408 = vmatprep.subr.mxu0 0.0
        %409 = vmatpush1.msra.mxu0 0.0
        %410 = vmatprep.subr.mxu0 0.0
        %411 = vmatpush1.msra.mxu0 0.0
        %412 = vmatprep.subr.mxu0 0.0
        %413 = vmatpush1.msra.mxu0 0.0
        %414 = vmatprep.subr.mxu0 0.0
        %415 = vmatpush1.msra.mxu0 0.0
        %416 = vmatprep.subr.mxu0 0.0
        %417 = vmatpush1.msra.mxu0 0.0
        %418 = vmatprep.subr.mxu0 0.0
        %419 = vmatpush1.msra.mxu0 0.0
        %420 = vmatprep.subr.mxu0 0.0
        %421 = vmatpush1.msra.mxu0 0.0
        %422 = vmatprep.subr.mxu0 0.0
        %423 = vmatpush1.msra.mxu0 0.0
        %424 = vmatprep.subr.mxu0 0.0
        %425 = vmatpush1.msra.mxu0 0.0
        %426 = vmatprep.subr.mxu0 0.0
        %427 = vmatpush1.msra.mxu0 0.0
        %428 = vmatprep.subr.mxu0 0.0
        %429 = vmatpush1.msra.mxu0 0.0
        %430 = vmatprep.subr.mxu0 0.0
        %431 = vmatpush1.msra.mxu0 0.0
        %432 = vmatprep.subr.mxu0 0.0
        %433 = vmatpush1.msra.mxu0 0.0
        %434 = vmatprep.subr.mxu0 0.0
        %435 = vmatpush1.msra.mxu0 0.0
        %436 = vmatprep.subr.mxu0 0.0
        %437 = vmatpush1.msra.mxu0 0.0
        %438 = vmatprep.mubr.f32.mxu0 0.0
        %439 = vmatmul.mubr.f32.gmra.mrb[0].mxu0 %v372
        %v440 = vpop.f32.mrb[0].mxu0
        %v441 = vadd.f32 0.0, %v440
        %v442 = vpop.f32.mrb[0].mxu0
        %443 = vdwg.mxu0
        %v444 = vmul.f32 %v441, 0.17677669
        %v445 = vld [vmem:[#allocation8] sm:$0xff]
        %v446 = vld [vmem:[#allocation8 + $0x8] sm:$0xff]
        %v447 = vld [vmem:[#allocation8 + $0x10] sm:$0xff]
        %v448 = vld [vmem:[#allocation8 + $0x18] sm:$0xff]
        %v450 = vsel %vm370, %v365, 0
        %452 = vmatprep.subr.mxu0 0.0
        %453 = vmatpush1.msra.mxu0 %v445
        %454 = vmatprep.subr.mxu0 0.0
        %455 = vmatpush1.msra.mxu0 %v446
        %456 = vmatprep.subr.mxu0 0.0
        %457 = vmatpush1.msra.mxu0 %v447
        %458 = vmatprep.subr.mxu0 0.0
        %459 = vmatpush1.msra.mxu0 %v448
        %460 = vmatprep.subr.mxu0 0.0
        %461 = vmatpush1.msra.mxu0 0.0
        %462 = vmatprep.subr.mxu0 0.0
        %463 = vmatpush1.msra.mxu0 0.0
        %464 = vmatprep.subr.mxu0 0.0
        %465 = vmatpush1.msra.mxu0 0.0
        %466 = vmatprep.subr.mxu0 0.0
        %467 = vmatpush1.msra.mxu0 0.0
        %468 = vmatprep.subr.mxu0 0.0
        %469 = vmatpush1.msra.mxu0 0.0
        %470 = vmatprep.subr.mxu0 0.0
        %471 = vmatpush1.msra.mxu0 0.0
        %472 = vmatprep.subr.mxu0 0.0
        %473 = vmatpush1.msra.mxu0 0.0
        %474 = vmatprep.subr.mxu0 0.0
        %475 = vmatpush1.msra.mxu0 0.0
        %476 = vmatprep.subr.mxu0 0.0
        %477 = vmatpush1.msra.mxu0 0.0
        %478 = vmatprep.subr.mxu0 0.0
        %479 = vmatpush1.msra.mxu0 0.0
        %480 = vmatprep.subr.mxu0 0.0
        %481 = vmatpush1.msra.mxu0 0.0
        %482 = vmatprep.subr.mxu0 0.0
        %483 = vmatpush1.msra.mxu0 0.0
        %484 = vmatprep.subr.mxu0 0.0
        %485 = vmatpush1.msra.mxu0 0.0
        %486 = vmatprep.subr.mxu0 0.0
        %487 = vmatpush1.msra.mxu0 0.0
        %488 = vmatprep.subr.mxu0 0.0
        %489 = vmatpush1.msra.mxu0 0.0
        %490 = vmatprep.subr.mxu0 0.0
        %491 = vmatpush1.msra.mxu0 0.0
        %492 = vmatprep.subr.mxu0 0.0
        %493 = vmatpush1.msra.mxu0 0.0
        %494 = vmatprep.subr.mxu0 0.0
        %495 = vmatpush1.msra.mxu0 0.0
        %496 = vmatprep.subr.mxu0 0.0
        %497 = vmatpush1.msra.mxu0 0.0
        %498 = vmatprep.subr.mxu0 0.0
        %499 = vmatpush1.msra.mxu0 0.0
        %500 = vmatprep.subr.mxu0 0.0
        %501 = vmatpush1.msra.mxu0 0.0
        %502 = vmatprep.subr.mxu0 0.0
        %503 = vmatpush1.msra.mxu0 0.0
        %504 = vmatprep.subr.mxu0 0.0
        %505 = vmatpush1.msra.mxu0 0.0
        %506 = vmatprep.subr.mxu0 0.0
        %507 = vmatpush1.msra.mxu0 0.0
        %508 = vmatprep.subr.mxu0 0.0
        %509 = vmatpush1.msra.mxu0 0.0
        %510 = vmatprep.subr.mxu0 0.0
        %511 = vmatpush1.msra.mxu0 0.0
        %512 = vmatprep.subr.mxu0 0.0
        %513 = vmatpush1.msra.mxu0 0.0
        %514 = vmatprep.subr.mxu0 0.0
        %515 = vmatpush1.msra.mxu0 0.0
        %516 = vmatprep.mubr.f32.mxu0 0.0
        %517 = vmatmul.mubr.f32.gmra.mrb[0].mxu0 %v450
        %v518 = vpop.f32.mrb[0].mxu0
        %v519 = vadd.f32 0.0, %v518
        %v520 = vpop.f32.mrb[0].mxu0
        %521 = vdwg.mxu0
        %s522 = smul.u32 %s32, 8
        %v523 = vlaneseq
        %v524 = vshrl.u32 %v523, 7
        %v525 = vstv %s522
        %v526 = vadd.s32 %v525, %v524
        %v527 = vlaneseq
        %v528 = vand.u32 %v527, 127
        %vm529 = vcmp.ge.s32.totalorder %v526, %v528
        %vm530 = vcmask 64512
        %v532 = vsel %vm530, %v444, 0
        %v535 = vsel %vm530, %v519, 0
        %537 = vmatprep.subr.mxu0 0.0
        %538 = vmatpush1.xpose.msra.mxu0 %v535
        %539 = vmatprep.subr.mxu0 0.0
        %540 = vmatpush1.xpose.msra.mxu0 0.0
        %541 = vmatprep.subr.mxu0 0.0
        %542 = vmatpush1.xpose.msra.mxu0 0.0
        %543 = vmatprep.subr.mxu0 0.0
        %544 = vmatpush1.xpose.msra.mxu0 0.0
        %545 = vmatprep.subr.mxu0 0.0
        %546 = vmatpush1.xpose.msra.mxu0 0.0
        %547 = vmatprep.subr.mxu0 0.0
        %548 = vmatpush1.xpose.msra.mxu0 0.0
        %549 = vmatprep.subr.mxu0 0.0
        %550 = vmatpush1.xpose.msra.mxu0 0.0
        %551 = vmatprep.subr.mxu0 0.0
        %552 = vmatpush1.xpose.msra.mxu0 0.0
        %553 = vmatprep.subr.mxu0 0.0
        %554 = vmatpush1.xpose.msra.mxu0 0.0
        %555 = vmatprep.subr.mxu0 0.0
        %556 = vmatpush1.xpose.msra.mxu0 0.0
        %557 = vmatprep.subr.mxu0 0.0
        %558 = vmatpush1.xpose.msra.mxu0 0.0
        %559 = vmatprep.subr.mxu0 0.0
        %560 = vmatpush1.xpose.msra.mxu0 0.0
        %561 = vmatprep.subr.mxu0 0.0
        %562 = vmatpush1.xpose.msra.mxu0 0.0
        %563 = vmatprep.subr.mxu0 0.0
        %564 = vmatpush1.xpose.msra.mxu0 0.0
        %565 = vmatprep.subr.mxu0 0.0
        %566 = vmatpush1.xpose.msra.mxu0 0.0
        %567 = vmatprep.subr.mxu0 0.0
        %568 = vmatpush1.xpose.msra.mxu0 0.0
        %569 = vmatprep.subr.mxu0 0.0
        %570 = vmatpush1.xpose.msra.mxu0 0.0
        %571 = vmatprep.subr.mxu0 0.0
        %572 = vmatpush1.xpose.msra.mxu0 0.0
        %573 = vmatprep.subr.mxu0 0.0
        %574 = vmatpush1.xpose.msra.mxu0 0.0
        %575 = vmatprep.subr.mxu0 0.0
        %576 = vmatpush1.xpose.msra.mxu0 0.0
        %577 = vmatprep.subr.mxu0 0.0
        %578 = vmatpush1.xpose.msra.mxu0 0.0
        %579 = vmatprep.subr.mxu0 0.0
        %580 = vmatpush1.xpose.msra.mxu0 0.0
        %581 = vmatprep.subr.mxu0 0.0
        %582 = vmatpush1.xpose.msra.mxu0 0.0
        %583 = vmatprep.subr.mxu0 0.0
        %584 = vmatpush1.xpose.msra.mxu0 0.0
        %585 = vmatprep.subr.mxu0 0.0
        %586 = vmatpush1.xpose.msra.mxu0 0.0
        %587 = vmatprep.subr.mxu0 0.0
        %588 = vmatpush1.xpose.msra.mxu0 0.0
        %589 = vmatprep.subr.mxu0 0.0
        %590 = vmatpush1.xpose.msra.mxu0 0.0
        %591 = vmatprep.subr.mxu0 0.0
        %592 = vmatpush1.xpose.msra.mxu0 0.0
        %593 = vmatprep.subr.mxu0 0.0
        %594 = vmatpush1.xpose.msra.mxu0 0.0
        %595 = vmatprep.subr.mxu0 0.0
        %596 = vmatpush1.xpose.msra.mxu0 0.0
        %597 = vmatprep.subr.mxu0 0.0
        %598 = vmatpush1.xpose.msra.mxu0 0.0
        %599 = vmatprep.subr.mxu0 0.0
        %600 = vmatpush1.xpose.msra.mxu0 0.0
        %601 = vmatprep.mubr.f32.mxu0 0.0
        %602 = vmatmul.mubr.f32.gmra.mrb[0].mxu0 %v532
        %v603 = vpop.f32.mrb[0].mxu0
        %v604 = vadd.f32 0.0, %v603
        %v605 = vpop.f32.mrb[0].mxu0
        %606 = vdwg.mxu0
        %v607 = vsel %vm529, %v604, -inf
        %v608 = vsel %vm530, %v607, -inf
        %609 = vmax.xlane.f32.xlu0 %v608
        %v610 = vpop.xlane.xlu0 %609
        %v611 = vsub.f32 %v607, %v610
        %v612 = vmul.f32 %v611, 1.442695
        %v613 = vpow.pop %v612
        %v614 = vsel %vm530, %v613, 0.0
        %615 = vadd.xlane.f32.xlu0 %v614
        %v616 = vpop.xlane.xlu0 %615
        %v617 = vrcp.pop %v616
        %v618 = vmul.f32 %v616, %v617
        %v619 = vsub.f32 2.0, %v618
        %v620 = vmul.f32 %v617, %v619
        %v621 = vmul.f32 %v613, %v620
        %622 = vrot.lane.b32.xlu0 %v519, 96
        %v623 = vpop.permute.xlu0 %622
        %v626 = vsel %vm530, %v621, 0
        %628 = vmatprep.subr.mxu0 0.0
        %629 = vmatpush1.msra.mxu0 %v623
        %630 = vmatprep.subr.mxu0 0.0
        %631 = vmatpush1.msra.mxu0 0.0
        %632 = vmatprep.subr.mxu0 0.0
        %633 = vmatpush1.msra.mxu0 0.0
        %634 = vmatprep.subr.mxu0 0.0
        %635 = vmatpush1.msra.mxu0 0.0
        %636 = vmatprep.subr.mxu0 0.0
        %637 = vmatpush1.msra.mxu0 0.0
        %638 = vmatprep.subr.mxu0 0.0
        %639 = vmatpush1.msra.mxu0 0.0
        %640 = vmatprep.subr.mxu0 0.0
        %641 = vmatpush1.msra.mxu0 0.0
        %642 = vmatprep.subr.mxu0 0.0
        %643 = vmatpush1.msra.mxu0 0.0
        %644 = vmatprep.subr.mxu0 0.0
        %645 = vmatpush1.msra.mxu0 0.0
        %646 = vmatprep.subr.mxu0 0.0
        %647 = vmatpush1.msra.mxu0 0.0
        %648 = vmatprep.subr.mxu0 0.0
        %649 = vmatpush1.msra.mxu0 0.0
        %650 = vmatprep.subr.mxu0 0.0
        %651 = vmatpush1.msra.mxu0 0.0
        %652 = vmatprep.subr.mxu0 0.0
        %653 = vmatpush1.msra.mxu0 0.0
        %654 = vmatprep.subr.mxu0 0.0
        %655 = vmatpush1.msra.mxu0 0.0
        %656 = vmatprep.subr.mxu0 0.0
        %657 = vmatpush1.msra.mxu0 0.0
        %658 = vmatprep.subr.mxu0 0.0
        %659 = vmatpush1.msra.mxu0 0.0
        %660 = vmatprep.subr.mxu0 0.0
        %661 = vmatpush1.msra.mxu0 0.0
        %662 = vmatprep.subr.mxu0 0.0
        %663 = vmatpush1.msra.mxu0 0.0
        %664 = vmatprep.subr.mxu0 0.0
        %665 = vmatpush1.msra.mxu0 0.0
        %666 = vmatprep.subr.mxu0 0.0
        %667 = vmatpush1.msra.mxu0 0.0
        %668 = vmatprep.subr.mxu0 0.0
        %669 = vmatpush1.msra.mxu0 0.0
        %670 = vmatprep.subr.mxu0 0.0
        %671 = vmatpush1.msra.mxu0 0.0
        %672 = vmatprep.subr.mxu0 0.0
        %673 = vmatpush1.msra.mxu0 0.0
        %674 = vmatprep.subr.mxu0 0.0
        %675 = vmatpush1.msra.mxu0 0.0
        %676 = vmatprep.subr.mxu0 0.0
        %677 = vmatpush1.msra.mxu0 0.0
        %678 = vmatprep.subr.mxu0 0.0
        %679 = vmatpush1.msra.mxu0 0.0
        %680 = vmatprep.subr.mxu0 0.0
        %681 = vmatpush1.msra.mxu0 0.0
        %682 = vmatprep.subr.mxu0 0.0
        %683 = vmatpush1.msra.mxu0 0.0
        %684 = vmatprep.subr.mxu0 0.0
        %685 = vmatpush1.msra.mxu0 0.0
        %686 = vmatprep.subr.mxu0 0.0
        %687 = vmatpush1.msra.mxu0 0.0
        %688 = vmatprep.subr.mxu0 0.0
        %689 = vmatpush1.msra.mxu0 0.0
        %690 = vmatprep.subr.mxu0 0.0
        %691 = vmatpush1.msra.mxu0 0.0
        %692 = vmatprep.mubr.f32.mxu0 0.0
        %693 = vmatmul.mubr.f32.gmra.mrb[0].mxu0 %v626
        %v694 = vpop.f32.mrb[0].mxu0
        %v695 = vadd.f32 0.0, %v694
        %v696 = vpop.f32.mrb[0].mxu0
        %697 = vdwg.mxu0
        %698 = vrot.lane.b32.xlu0 %v444, 120
        %v699 = vpop.permute.xlu0 %698
        %700 = vrot.lane.b32.xlu0 %v519, 120
        %v701 = vpop.permute.xlu0 %700
        %v702 = vsel %vm530, %v699, 0
        %v704 = vsel %vm530, %v701, 0
        %706 = vmatprep.subr.mxu0 0.0
        %707 = vmatpush1.xpose.msra.mxu0 %v704
        %708 = vmatprep.subr.mxu0 0.0
        %709 = vmatpush1.xpose.msra.mxu0 0.0
        %710 = vmatprep.subr.mxu0 0.0
        %711 = vmatpush1.xpose.msra.mxu0 0.0
        %712 = vmatprep.subr.mxu0 0.0
        %713 = vmatpush1.xpose.msra.mxu0 0.0
        %714 = vmatprep.subr.mxu0 0.0
        %715 = vmatpush1.xpose.msra.mxu0 0.0
        %716 = vmatprep.subr.mxu0 0.0
        %717 = vmatpush1.xpose.msra.mxu0 0.0
        %718 = vmatprep.subr.mxu0 0.0
        %719 = vmatpush1.xpose.msra.mxu0 0.0
        %720 = vmatprep.subr.mxu0 0.0
        %721 = vmatpush1.xpose.msra.mxu0 0.0
        %722 = vmatprep.subr.mxu0 0.0
        %723 = vmatpush1.xpose.msra.mxu0 0.0
        %724 = vmatprep.subr.mxu0 0.0
        %725 = vmatpush1.xpose.msra.mxu0 0.0
        %726 = vmatprep.subr.mxu0 0.0
        %727 = vmatpush1.xpose.msra.mxu0 0.0
        %728 = vmatprep.subr.mxu0 0.0
        %729 = vmatpush1.xpose.msra.mxu0 0.0
        %730 = vmatprep.subr.mxu0 0.0
        %731 = vmatpush1.xpose.msra.mxu0 0.0
        %732 = vmatprep.subr.mxu0 0.0
        %733 = vmatpush1.xpose.msra.mxu0 0.0
        %734 = vmatprep.subr.mxu0 0.0
        %735 = vmatpush1.xpose.msra.mxu0 0.0
        %736 = vmatprep.subr.mxu0 0.0
        %737 = vmatpush1.xpose.msra.mxu0 0.0
        %738 = vmatprep.subr.mxu0 0.0
        %739 = vmatpush1.xpose.msra.mxu0 0.0
        %740 = vmatprep.subr.mxu0 0.0
        %741 = vmatpush1.xpose.msra.mxu0 0.0
        %742 = vmatprep.subr.mxu0 0.0
        %743 = vmatpush1.xpose.msra.mxu0 0.0
        %744 = vmatprep.subr.mxu0 0.0
        %745 = vmatpush1.xpose.msra.mxu0 0.0
        %746 = vmatprep.subr.mxu0 0.0
        %747 = vmatpush1.xpose.msra.mxu0 0.0
        %748 = vmatprep.subr.mxu0 0.0
        %749 = vmatpush1.xpose.msra.mxu0 0.0
        %750 = vmatprep.subr.mxu0 0.0
        %751 = vmatpush1.xpose.msra.mxu0 0.0
        %752 = vmatprep.subr.mxu0 0.0
        %753 = vmatpush1.xpose.msra.mxu0 0.0
        %754 = vmatprep.subr.mxu0 0.0
        %755 = vmatpush1.xpose.msra.mxu0 0.0
        %756 = vmatprep.subr.mxu0 0.0
        %757 = vmatpush1.xpose.msra.mxu0 0.0
        %758 = vmatprep.subr.mxu0 0.0
        %759 = vmatpush1.xpose.msra.mxu0 0.0
        %760 = vmatprep.subr.mxu0 0.0
        %761 = vmatpush1.xpose.msra.mxu0 0.0
        %762 = vmatprep.subr.mxu0 0.0
        %763 = vmatpush1.xpose.msra.mxu0 0.0
        %764 = vmatprep.subr.mxu0 0.0
        %765 = vmatpush1.xpose.msra.mxu0 0.0
        %766 = vmatprep.subr.mxu0 0.0
        %767 = vmatpush1.xpose.msra.mxu0 0.0
        %768 = vmatprep.subr.mxu0 0.0
        %769 = vmatpush1.xpose.msra.mxu0 0.0
        %770 = vmatprep.mubr.f32.mxu0 0.0
        %771 = vmatmul.mubr.f32.gmra.mrb[0].mxu0 %v702
        %v772 = vpop.f32.mrb[0].mxu0
        %v773 = vadd.f32 0.0, %v772
        %v774 = vpop.f32.mrb[0].mxu0
        %775 = vdwg.mxu0
        %v776 = vsel %vm529, %v773, -inf
        %v777 = vsel %vm530, %v776, -inf
        %778 = vmax.xlane.f32.xlu0 %v777
        %v779 = vpop.xlane.xlu0 %778
        %v780 = vsub.f32 %v776, %v779
        %v781 = vmul.f32 %v780, 1.442695
        %v782 = vpow.pop %v781
        %v783 = vsel %vm530, %v782, 0.0
        %784 = vadd.xlane.f32.xlu0 %v783
        %v785 = vpop.xlane.xlu0 %784
        %v786 = vrcp.pop %v785
        %v787 = vmul.f32 %v785, %v786
        %v788 = vsub.f32 2.0, %v787
        %v789 = vmul.f32 %v786, %v788
        %v790 = vmul.f32 %v782, %v789
        %791 = vrot.lane.b32.xlu0 %v519, 88
        %v792 = vpop.permute.xlu0 %791
        %v795 = vsel %vm530, %v790, 0
        %797 = vmatprep.subr.mxu0 0.0
        %798 = vmatpush1.msra.mxu0 %v792
        %799 = vmatprep.subr.mxu0 0.0
        %800 = vmatpush1.msra.mxu0 0.0
        %801 = vmatprep.subr.mxu0 0.0
        %802 = vmatpush1.msra.mxu0 0.0
        %803 = vmatprep.subr.mxu0 0.0
        %804 = vmatpush1.msra.mxu0 0.0
        %805 = vmatprep.subr.mxu0 0.0
        %806 = vmatpush1.msra.mxu0 0.0
        %807 = vmatprep.subr.mxu0 0.0
        %808 = vmatpush1.msra.mxu0 0.0
        %809 = vmatprep.subr.mxu0 0.0
        %810 = vmatpush1.msra.mxu0 0.0
        %811 = vmatprep.subr.mxu0 0.0
        %812 = vmatpush1.msra.mxu0 0.0
        %813 = vmatprep.subr.mxu0 0.0
        %814 = vmatpush1.msra.mxu0 0.0
        %815 = vmatprep.subr.mxu0 0.0
        %816 = vmatpush1.msra.mxu0 0.0
        %817 = vmatprep.subr.mxu0 0.0
        %818 = vmatpush1.msra.mxu0 0.0
        %819 = vmatprep.subr.mxu0 0.0
        %820 = vmatpush1.msra.mxu0 0.0
        %821 = vmatprep.subr.mxu0 0.0
        %822 = vmatpush1.msra.mxu0 0.0
        %823 = vmatprep.subr.mxu0 0.0
        %824 = vmatpush1.msra.mxu0 0.0
        %825 = vmatprep.subr.mxu0 0.0
        %826 = vmatpush1.msra.mxu0 0.0
        %827 = vmatprep.subr.mxu0 0.0
        %828 = vmatpush1.msra.mxu0 0.0
        %829 = vmatprep.subr.mxu0 0.0
        %830 = vmatpush1.msra.mxu0 0.0
        %831 = vmatprep.subr.mxu0 0.0
        %832 = vmatpush1.msra.mxu0 0.0
        %833 = vmatprep.subr.mxu0 0.0
        %834 = vmatpush1.msra.mxu0 0.0
        %835 = vmatprep.subr.mxu0 0.0
        %836 = vmatpush1.msra.mxu0 0.0
        %837 = vmatprep.subr.mxu0 0.0
        %838 = vmatpush1.msra.mxu0 0.0
        %839 = vmatprep.subr.mxu0 0.0
        %840 = vmatpush1.msra.mxu0 0.0
        %841 = vmatprep.subr.mxu0 0.0
        %842 = vmatpush1.msra.mxu0 0.0
        %843 = vmatprep.subr.mxu0 0.0
        %844 = vmatpush1.msra.mxu0 0.0
        %845 = vmatprep.subr.mxu0 0.0
        %846 = vmatpush1.msra.mxu0 0.0
        %847 = vmatprep.subr.mxu0 0.0
        %848 = vmatpush1.msra.mxu0 0.0
        %849 = vmatprep.subr.mxu0 0.0
        %850 = vmatpush1.msra.mxu0 0.0
        %851 = vmatprep.subr.mxu0 0.0
        %852 = vmatpush1.msra.mxu0 0.0
        %853 = vmatprep.subr.mxu0 0.0
        %854 = vmatpush1.msra.mxu0 0.0
        %855 = vmatprep.subr.mxu0 0.0
        %856 = vmatpush1.msra.mxu0 0.0
        %857 = vmatprep.subr.mxu0 0.0
        %858 = vmatpush1.msra.mxu0 0.0
        %859 = vmatprep.subr.mxu0 0.0
        %860 = vmatpush1.msra.mxu0 0.0
        %861 = vmatprep.mubr.f32.mxu0 0.0
        %862 = vmatmul.mubr.f32.gmra.mrb[0].mxu0 %v795
        %v863 = vpop.f32.mrb[0].mxu0
        %v864 = vadd.f32 0.0, %v863
        %v865 = vpop.f32.mrb[0].mxu0
        %866 = vdwg.mxu0
        %867 = vrot.lane.b32.xlu0 %v444, 112
        %v868 = vpop.permute.xlu0 %867
        %869 = vrot.lane.b32.xlu0 %v519, 112
        %v870 = vpop.permute.xlu0 %869
        %v871 = vsel %vm530, %v868, 0
        %v873 = vsel %vm530, %v870, 0
        %875 = vmatprep.subr.mxu0 0.0
        %876 = vmatpush1.xpose.msra.mxu0 %v873
        %877 = vmatprep.subr.mxu0 0.0
        %878 = vmatpush1.xpose.msra.mxu0 0.0
        %879 = vmatprep.subr.mxu0 0.0
        %880 = vmatpush1.xpose.msra.mxu0 0.0
        %881 = vmatprep.subr.mxu0 0.0
        %882 = vmatpush1.xpose.msra.mxu0 0.0
        %883 = vmatprep.subr.mxu0 0.0
        %884 = vmatpush1.xpose.msra.mxu0 0.0
        %885 = vmatprep.subr.mxu0 0.0
        %886 = vmatpush1.xpose.msra.mxu0 0.0
        %887 = vmatprep.subr.mxu0 0.0
        %888 = vmatpush1.xpose.msra.mxu0 0.0
        %889 = vmatprep.subr.mxu0 0.0
        %890 = vmatpush1.xpose.msra.mxu0 0.0
        %891 = vmatprep.subr.mxu0 0.0
        %892 = vmatpush1.xpose.msra.mxu0 0.0
        %893 = vmatprep.subr.mxu0 0.0
        %894 = vmatpush1.xpose.msra.mxu0 0.0
        %895 = vmatprep.subr.mxu0 0.0
        %896 = vmatpush1.xpose.msra.mxu0 0.0
        %897 = vmatprep.subr.mxu0 0.0
        %898 = vmatpush1.xpose.msra.mxu0 0.0
        %899 = vmatprep.subr.mxu0 0.0
        %900 = vmatpush1.xpose.msra.mxu0 0.0
        %901 = vmatprep.subr.mxu0 0.0
        %902 = vmatpush1.xpose.msra.mxu0 0.0
        %903 = vmatprep.subr.mxu0 0.0
        %904 = vmatpush1.xpose.msra.mxu0 0.0
        %905 = vmatprep.subr.mxu0 0.0
        %906 = vmatpush1.xpose.msra.mxu0 0.0
        %907 = vmatprep.subr.mxu0 0.0
        %908 = vmatpush1.xpose.msra.mxu0 0.0
        %909 = vmatprep.subr.mxu0 0.0
        %910 = vmatpush1.xpose.msra.mxu0 0.0
        %911 = vmatprep.subr.mxu0 0.0
        %912 = vmatpush1.xpose.msra.mxu0 0.0
        %913 = vmatprep.subr.mxu0 0.0
        %914 = vmatpush1.xpose.msra.mxu0 0.0
        %915 = vmatprep.subr.mxu0 0.0
        %916 = vmatpush1.xpose.msra.mxu0 0.0
        %917 = vmatprep.subr.mxu0 0.0
        %918 = vmatpush1.xpose.msra.mxu0 0.0
        %919 = vmatprep.subr.mxu0 0.0
        %920 = vmatpush1.xpose.msra.mxu0 0.0
        %921 = vmatprep.subr.mxu0 0.0
        %922 = vmatpush1.xpose.msra.mxu0 0.0
        %923 = vmatprep.subr.mxu0 0.0
        %924 = vmatpush1.xpose.msra.mxu0 0.0
        %925 = vmatprep.subr.mxu0 0.0
        %926 = vmatpush1.xpose.msra.mxu0 0.0
        %927 = vmatprep.subr.mxu0 0.0
        %928 = vmatpush1.xpose.msra.mxu0 0.0
        %929 = vmatprep.subr.mxu0 0.0
        %930 = vmatpush1.xpose.msra.mxu0 0.0
        %931 = vmatprep.subr.mxu0 0.0
        %932 = vmatpush1.xpose.msra.mxu0 0.0
        %933 = vmatprep.subr.mxu0 0.0
        %934 = vmatpush1.xpose.msra.mxu0 0.0
        %935 = vmatprep.subr.mxu0 0.0
        %936 = vmatpush1.xpose.msra.mxu0 0.0
        %937 = vmatprep.subr.mxu0 0.0
        %938 = vmatpush1.xpose.msra.mxu0 0.0
        %939 = vmatprep.mubr.f32.mxu0 0.0
        %940 = vmatmul.mubr.f32.gmra.mrb[0].mxu0 %v871
        %v941 = vpop.f32.mrb[0].mxu0
        %v942 = vadd.f32 0.0, %v941
        %v943 = vpop.f32.mrb[0].mxu0
        %944 = vdwg.mxu0
        %v945 = vsel %vm529, %v942, -inf
        %v946 = vsel %vm530, %v945, -inf
        %947 = vmax.xlane.f32.xlu0 %v946
        %v948 = vpop.xlane.xlu0 %947
        %v949 = vsub.f32 %v945, %v948
        %v950 = vmul.f32 %v949, 1.442695
        %v951 = vpow.pop %v950
        %v952 = vsel %vm530, %v951, 0.0
        %953 = vadd.xlane.f32.xlu0 %v952
        %v954 = vpop.xlane.xlu0 %953
        %v955 = vrcp.pop %v954
        %v956 = vmul.f32 %v954, %v955
        %v957 = vsub.f32 2.0, %v956
        %v958 = vmul.f32 %v955, %v957
        %v959 = vmul.f32 %v951, %v958
        %960 = vrot.lane.b32.xlu0 %v519, 80
        %v961 = vpop.permute.xlu0 %960
        %v964 = vsel %vm530, %v959, 0
        %966 = vmatprep.subr.mxu0 0.0
        %967 = vmatpush1.msra.mxu0 %v961
        %968 = vmatprep.subr.mxu0 0.0
        %969 = vmatpush1.msra.mxu0 0.0
        %970 = vmatprep.subr.mxu0 0.0
        %971 = vmatpush1.msra.mxu0 0.0
        %972 = vmatprep.subr.mxu0 0.0
        %973 = vmatpush1.msra.mxu0 0.0
        %974 = vmatprep.subr.mxu0 0.0
        %975 = vmatpush1.msra.mxu0 0.0
        %976 = vmatprep.subr.mxu0 0.0
        %977 = vmatpush1.msra.mxu0 0.0
        %978 = vmatprep.subr.mxu0 0.0
        %979 = vmatpush1.msra.mxu0 0.0
        %980 = vmatprep.subr.mxu0 0.0
        %981 = vmatpush1.msra.mxu0 0.0
        %982 = vmatprep.subr.mxu0 0.0
        %983 = vmatpush1.msra.mxu0 0.0
        %984 = vmatprep.subr.mxu0 0.0
        %985 = vmatpush1.msra.mxu0 0.0
        %986 = vmatprep.subr.mxu0 0.0
        %987 = vmatpush1.msra.mxu0 0.0
        %988 = vmatprep.subr.mxu0 0.0
        %989 = vmatpush1.msra.mxu0 0.0
        %990 = vmatprep.subr.mxu0 0.0
        %991 = vmatpush1.msra.mxu0 0.0
        %992 = vmatprep.subr.mxu0 0.0
        %993 = vmatpush1.msra.mxu0 0.0
        %994 = vmatprep.subr.mxu0 0.0
        %995 = vmatpush1.msra.mxu0 0.0
        %996 = vmatprep.subr.mxu0 0.0
        %997 = vmatpush1.msra.mxu0 0.0
        %998 = vmatprep.subr.mxu0 0.0
        %999 = vmatpush1.msra.mxu0 0.0
        %1000 = vmatprep.subr.mxu0 0.0
        %1001 = vmatpush1.msra.mxu0 0.0
        %1002 = vmatprep.subr.mxu0 0.0
        %1003 = vmatpush1.msra.mxu0 0.0
        %1004 = vmatprep.subr.mxu0 0.0
        %1005 = vmatpush1.msra.mxu0 0.0
        %1006 = vmatprep.subr.mxu0 0.0
        %1007 = vmatpush1.msra.mxu0 0.0
        %1008 = vmatprep.subr.mxu0 0.0
        %1009 = vmatpush1.msra.mxu0 0.0
        %1010 = vmatprep.subr.mxu0 0.0
        %1011 = vmatpush1.msra.mxu0 0.0
        %1012 = vmatprep.subr.mxu0 0.0
        %1013 = vmatpush1.msra.mxu0 0.0
        %1014 = vmatprep.subr.mxu0 0.0
        %1015 = vmatpush1.msra.mxu0 0.0
        %1016 = vmatprep.subr.mxu0 0.0
        %1017 = vmatpush1.msra.mxu0 0.0
        %1018 = vmatprep.subr.mxu0 0.0
        %1019 = vmatpush1.msra.mxu0 0.0
        %1020 = vmatprep.subr.mxu0 0.0
        %1021 = vmatpush1.msra.mxu0 0.0
        %1022 = vmatprep.subr.mxu0 0.0
        %1023 = vmatpush1.msra.mxu0 0.0
        %1024 = vmatprep.subr.mxu0 0.0
        %1025 = vmatpush1.msra.mxu0 0.0
        %1026 = vmatprep.subr.mxu0 0.0
        %1027 = vmatpush1.msra.mxu0 0.0
        %1028 = vmatprep.subr.mxu0 0.0
        %1029 = vmatpush1.msra.mxu0 0.0
        %1030 = vmatprep.mubr.f32.mxu0 0.0
        %1031 = vmatmul.mubr.f32.gmra.mrb[0].mxu0 %v964
        %v1032 = vpop.f32.mrb[0].mxu0
        %v1033 = vadd.f32 0.0, %v1032
        %v1034 = vpop.f32.mrb[0].mxu0
        %1035 = vdwg.mxu0
        %1036 = vrot.lane.b32.xlu0 %v444, 104
        %v1037 = vpop.permute.xlu0 %1036
        %1038 = vrot.lane.b32.xlu0 %v519, 104
        %v1039 = vpop.permute.xlu0 %1038
        %v1040 = vsel %vm530, %v1037, 0
        %v1042 = vsel %vm530, %v1039, 0
        %1044 = vmatprep.subr.mxu0 0.0
        %1045 = vmatpush1.xpose.msra.mxu0 %v1042
        %1046 = vmatprep.subr.mxu0 0.0
        %1047 = vmatpush1.xpose.msra.mxu0 0.0
        %1048 = vmatprep.subr.mxu0 0.0
        %1049 = vmatpush1.xpose.msra.mxu0 0.0
        %1050 = vmatprep.subr.mxu0 0.0
        %1051 = vmatpush1.xpose.msra.mxu0 0.0
        %1052 = vmatprep.subr.mxu0 0.0
        %1053 = vmatpush1.xpose.msra.mxu0 0.0
        %1054 = vmatprep.subr.mxu0 0.0
        %1055 = vmatpush1.xpose.msra.mxu0 0.0
        %1056 = vmatprep.subr.mxu0 0.0
        %1057 = vmatpush1.xpose.msra.mxu0 0.0
        %1058 = vmatprep.subr.mxu0 0.0
        %1059 = vmatpush1.xpose.msra.mxu0 0.0
        %1060 = vmatprep.subr.mxu0 0.0
        %1061 = vmatpush1.xpose.msra.mxu0 0.0
        %1062 = vmatprep.subr.mxu0 0.0
        %1063 = vmatpush1.xpose.msra.mxu0 0.0
        %1064 = vmatprep.subr.mxu0 0.0
        %1065 = vmatpush1.xpose.msra.mxu0 0.0
        %1066 = vmatprep.subr.mxu0 0.0
        %1067 = vmatpush1.xpose.msra.mxu0 0.0
        %1068 = vmatprep.subr.mxu0 0.0
        %1069 = vmatpush1.xpose.msra.mxu0 0.0
        %1070 = vmatprep.subr.mxu0 0.0
        %1071 = vmatpush1.xpose.msra.mxu0 0.0
        %1072 = vmatprep.subr.mxu0 0.0
        %1073 = vmatpush1.xpose.msra.mxu0 0.0
        %1074 = vmatprep.subr.mxu0 0.0
        %1075 = vmatpush1.xpose.msra.mxu0 0.0
        %1076 = vmatprep.subr.mxu0 0.0
        %1077 = vmatpush1.xpose.msra.mxu0 0.0
        %1078 = vmatprep.subr.mxu0 0.0
        %1079 = vmatpush1.xpose.msra.mxu0 0.0
        %1080 = vmatprep.subr.mxu0 0.0
        %1081 = vmatpush1.xpose.msra.mxu0 0.0
        %1082 = vmatprep.subr.mxu0 0.0
        %1083 = vmatpush1.xpose.msra.mxu0 0.0
        %1084 = vmatprep.subr.mxu0 0.0
        %1085 = vmatpush1.xpose.msra.mxu0 0.0
        %1086 = vmatprep.subr.mxu0 0.0
        %1087 = vmatpush1.xpose.msra.mxu0 0.0
        %1088 = vmatprep.subr.mxu0 0.0
        %1089 = vmatpush1.xpose.msra.mxu0 0.0
        %1090 = vmatprep.subr.mxu0 0.0
        %1091 = vmatpush1.xpose.msra.mxu0 0.0
        %1092 = vmatprep.subr.mxu0 0.0
        %1093 = vmatpush1.xpose.msra.mxu0 0.0
        %1094 = vmatprep.subr.mxu0 0.0
        %1095 = vmatpush1.xpose.msra.mxu0 0.0
        %1096 = vmatprep.subr.mxu0 0.0
        %1097 = vmatpush1.xpose.msra.mxu0 0.0
        %1098 = vmatprep.subr.mxu0 0.0
        %1099 = vmatpush1.xpose.msra.mxu0 0.0
        %1100 = vmatprep.subr.mxu0 0.0
        %1101 = vmatpush1.xpose.msra.mxu0 0.0
        %1102 = vmatprep.subr.mxu0 0.0
        %1103 = vmatpush1.xpose.msra.mxu0 0.0
        %1104 = vmatprep.subr.mxu0 0.0
        %1105 = vmatpush1.xpose.msra.mxu0 0.0
        %1106 = vmatprep.subr.mxu0 0.0
        %1107 = vmatpush1.xpose.msra.mxu0 0.0
        %1108 = vmatprep.mubr.f32.mxu0 0.0
        %1109 = vmatmul.mubr.f32.gmra.mrb[0].mxu0 %v1040
        %v1110 = vpop.f32.mrb[0].mxu0
        %v1111 = vadd.f32 0.0, %v1110
        %v1112 = vpop.f32.mrb[0].mxu0
        %1113 = vdwg.mxu0
        %v1114 = vsel %vm529, %v1111, -inf
        %v1115 = vsel %vm530, %v1114, -inf
        %1116 = vmax.xlane.f32.xlu0 %v1115
        %v1117 = vpop.xlane.xlu0 %1116
        %v1118 = vsub.f32 %v1114, %v1117
        %v1119 = vmul.f32 %v1118, 1.442695
        %v1120 = vpow.pop %v1119
        %v1121 = vsel %vm530, %v1120, 0.0
        %1122 = vadd.xlane.f32.xlu0 %v1121
        %v1123 = vpop.xlane.xlu0 %1122
        %v1124 = vrcp.pop %v1123
        %v1125 = vmul.f32 %v1123, %v1124
        %v1126 = vsub.f32 2.0, %v1125
        %v1127 = vmul.f32 %v1124, %v1126
        %v1128 = vmul.f32 %v1120, %v1127
        %1129 = vrot.lane.b32.xlu0 %v519, 72
        %v1130 = vpop.permute.xlu0 %1129
        %v1133 = vsel %vm530, %v1128, 0
        %1135 = vmatprep.subr.mxu0 0.0
        %1136 = vmatpush1.msra.mxu0 %v1130
        %1137 = vmatprep.subr.mxu0 0.0
        %1138 = vmatpush1.msra.mxu0 0.0
        %1139 = vmatprep.subr.mxu0 0.0
        %1140 = vmatpush1.msra.mxu0 0.0
        %1141 = vmatprep.subr.mxu0 0.0
        %1142 = vmatpush1.msra.mxu0 0.0
        %1143 = vmatprep.subr.mxu0 0.0
        %1144 = vmatpush1.msra.mxu0 0.0
        %1145 = vmatprep.subr.mxu0 0.0
        %1146 = vmatpush1.msra.mxu0 0.0
        %1147 = vmatprep.subr.mxu0 0.0
        %1148 = vmatpush1.msra.mxu0 0.0
        %1149 = vmatprep.subr.mxu0 0.0
        %1150 = vmatpush1.msra.mxu0 0.0
        %1151 = vmatprep.subr.mxu0 0.0
        %1152 = vmatpush1.msra.mxu0 0.0
        %1153 = vmatprep.subr.mxu0 0.0
        %1154 = vmatpush1.msra.mxu0 0.0
        %1155 = vmatprep.subr.mxu0 0.0
        %1156 = vmatpush1.msra.mxu0 0.0
        %1157 = vmatprep.subr.mxu0 0.0
        %1158 = vmatpush1.msra.mxu0 0.0
        %1159 = vmatprep.subr.mxu0 0.0
        %1160 = vmatpush1.msra.mxu0 0.0
        %1161 = vmatprep.subr.mxu0 0.0
        %1162 = vmatpush1.msra.mxu0 0.0
        %1163 = vmatprep.subr.mxu0 0.0
        %1164 = vmatpush1.msra.mxu0 0.0
        %1165 = vmatprep.subr.mxu0 0.0
        %1166 = vmatpush1.msra.mxu0 0.0
        %1167 = vmatprep.subr.mxu0 0.0
        %1168 = vmatpush1.msra.mxu0 0.0
        %1169 = vmatprep.subr.mxu0 0.0
        %1170 = vmatpush1.msra.mxu0 0.0
        %1171 = vmatprep.subr.mxu0 0.0
        %1172 = vmatpush1.msra.mxu0 0.0
        %1173 = vmatprep.subr.mxu0 0.0
        %1174 = vmatpush1.msra.mxu0 0.0
        %1175 = vmatprep.subr.mxu0 0.0
        %1176 = vmatpush1.msra.mxu0 0.0
        %1177 = vmatprep.subr.mxu0 0.0
        %1178 = vmatpush1.msra.mxu0 0.0
        %1179 = vmatprep.subr.mxu0 0.0
        %1180 = vmatpush1.msra.mxu0 0.0
        %1181 = vmatprep.subr.mxu0 0.0
        %1182 = vmatpush1.msra.mxu0 0.0
        %1183 = vmatprep.subr.mxu0 0.0
        %1184 = vmatpush1.msra.mxu0 0.0
        %1185 = vmatprep.subr.mxu0 0.0
        %1186 = vmatpush1.msra.mxu0 0.0
        %1187 = vmatprep.subr.mxu0 0.0
        %1188 = vmatpush1.msra.mxu0 0.0
        %1189 = vmatprep.subr.mxu0 0.0
        %1190 = vmatpush1.msra.mxu0 0.0
        %1191 = vmatprep.subr.mxu0 0.0
        %1192 = vmatpush1.msra.mxu0 0.0
        %1193 = vmatprep.subr.mxu0 0.0
        %1194 = vmatpush1.msra.mxu0 0.0
        %1195 = vmatprep.subr.mxu0 0.0
        %1196 = vmatpush1.msra.mxu0 0.0
        %1197 = vmatprep.subr.mxu0 0.0
        %1198 = vmatpush1.msra.mxu0 0.0
        %1199 = vmatprep.mubr.f32.mxu0 0.0
        %1200 = vmatmul.mubr.f32.gmra.mrb[0].mxu0 %v1133
        %v1201 = vpop.f32.mrb[0].mxu0
        %v1202 = vadd.f32 0.0, %v1201
        %v1203 = vpop.f32.mrb[0].mxu0
        %1204 = vdwg.mxu0
        %1206 = vrot.lane.b32.xlu0 %v864, 8
        %v1207 = vpop.permute.xlu0 %1206
        %1210 = vrot.lane.b32.xlu0 %v1033, 16
        %v1211 = vpop.permute.xlu0 %1210
        %1214 = vrot.lane.b32.xlu0 %v1202, 24
        %v1215 = vpop.permute.xlu0 %1214
        %v1217 = vsel %vm530, %v695, %v1207
        %vm1218 = vcmask 130048
        %v1219 = vsel %vm1218, %v1217, %v1211
        %vm1220 = vcmask 195584
        %v1221 = vsel %vm1220, %v1219, %v1215
        %v1222 = vld [vmem:[#allocation10] sm:$0xff]
        %v1223 = vld [vmem:[#allocation10 + $0x8] sm:$0xff]
        %v1224 = vld [vmem:[#allocation10 + $0x10] sm:$0xff]
        %v1225 = vld [vmem:[#allocation10 + $0x18] sm:$0xff]
        %v1226 = vld [vmem:[%s5] sm:$0x1]
        %v1228 = vlaneseq
        %v1229 = vshrl.u32 %v1228, 7
        %v1230 = vsub.s32 0, %v1229
        %v1231 = vrot.slane %v1226, %v1230
        %v1234 = vsel %vm370, %v1221, 0
        %1236 = vmatprep.subr.mxu0 0.0
        %1237 = vmatpush1.msra.mxu0 %v1222
        %1238 = vmatprep.subr.mxu0 0.0
        %1239 = vmatpush1.msra.mxu0 %v1223
        %1240 = vmatprep.subr.mxu0 0.0
        %1241 = vmatpush1.msra.mxu0 %v1224
        %1242 = vmatprep.subr.mxu0 0.0
        %1243 = vmatpush1.msra.mxu0 %v1225
        %1244 = vmatprep.subr.mxu0 0.0
        %1245 = vmatpush1.msra.mxu0 0.0
        %1246 = vmatprep.subr.mxu0 0.0
        %1247 = vmatpush1.msra.mxu0 0.0
        %1248 = vmatprep.subr.mxu0 0.0
        %1249 = vmatpush1.msra.mxu0 0.0
        %1250 = vmatprep.subr.mxu0 0.0
        %1251 = vmatpush1.msra.mxu0 0.0
        %1252 = vmatprep.subr.mxu0 0.0
        %1253 = vmatpush1.msra.mxu0 0.0
        %1254 = vmatprep.subr.mxu0 0.0
        %1255 = vmatpush1.msra.mxu0 0.0
        %1256 = vmatprep.subr.mxu0 0.0
        %1257 = vmatpush1.msra.mxu0 0.0
        %1258 = vmatprep.subr.mxu0 0.0
        %1259 = vmatpush1.msra.mxu0 0.0
        %1260 = vmatprep.subr.mxu0 0.0
        %1261 = vmatpush1.msra.mxu0 0.0
        %1262 = vmatprep.subr.mxu0 0.0
        %1263 = vmatpush1.msra.mxu0 0.0
        %1264 = vmatprep.subr.mxu0 0.0
        %1265 = vmatpush1.msra.mxu0 0.0
        %1266 = vmatprep.subr.mxu0 0.0
        %1267 = vmatpush1.msra.mxu0 0.0
        %1268 = vmatprep.subr.mxu0 0.0
        %1269 = vmatpush1.msra.mxu0 0.0
        %1270 = vmatprep.subr.mxu0 0.0
        %1271 = vmatpush1.msra.mxu0 0.0
        %1272 = vmatprep.subr.mxu0 0.0
        %1273 = vmatpush1.msra.mxu0 0.0
        %1274 = vmatprep.subr.mxu0 0.0
        %1275 = vmatpush1.msra.mxu0 0.0
        %1276 = vmatprep.subr.mxu0 0.0
        %1277 = vmatpush1.msra.mxu0 0.0
        %1278 = vmatprep.subr.mxu0 0.0
        %1279 = vmatpush1.msra.mxu0 0.0
        %1280 = vmatprep.subr.mxu0 0.0
        %1281 = vmatpush1.msra.mxu0 0.0
        %1282 = vmatprep.subr.mxu0 0.0
        %1283 = vmatpush1.msra.mxu0 0.0
        %1284 = vmatprep.subr.mxu0 0.0
        %1285 = vmatpush1.msra.mxu0 0.0
        %1286 = vmatprep.subr.mxu0 0.0
        %1287 = vmatpush1.msra.mxu0 0.0
        %1288 = vmatprep.subr.mxu0 0.0
        %1289 = vmatpush1.msra.mxu0 0.0
        %1290 = vmatprep.subr.mxu0 0.0
        %1291 = vmatpush1.msra.mxu0 0.0
        %1292 = vmatprep.subr.mxu0 0.0
        %1293 = vmatpush1.msra.mxu0 0.0
        %1294 = vmatprep.subr.mxu0 0.0
        %1295 = vmatpush1.msra.mxu0 0.0
        %1296 = vmatprep.subr.mxu0 0.0
        %1297 = vmatpush1.msra.mxu0 0.0
        %1298 = vmatprep.subr.mxu0 0.0
        %1299 = vmatpush1.msra.mxu0 0.0
        %1300 = vmatprep.mubr.f32.mxu0 0.0
        %1301 = vmatmul.mubr.f32.gmra.mrb[0].mxu0 %v1234
        %v1302 = vpop.f32.mrb[0].mxu0
        %v1303 = vadd.f32 %v1231, %v1302
        %v1304 = vpop.f32.mrb[0].mxu0
        %1305 = vdwg.mxu0
        %1306 = vst.msk [vmem:[%s363] sm:$0xff] %vm370, %v1303
        %s1307 = sand.u32 %s187, 1
        %s1308 = scalar_lea.sflag [#allocation4], %s1307
        %s1309 = sand.u32 %s187, 1
        %s1310 = smul.addr %s1309, 8
        %s1311 = scalar_lea.vmem [#allocation11], %s1310
        // Predicated region
        $region65: #{tpu_custom_call.1} parent=43 // pred_check
          %p1312 = pneg %p197
        $region66: #{tpu_custom_call.1} parent=43 // pred_check_branch
          %1314 = sbr.rel (%p1312) target = $region68
        $region67: #{tpu_custom_call.1} parent=43 // pred_region
          %s1316 = ssub.s32 128, 128
          %1317 = vsyncadd %s1308, %s1316
          %s1318 = sadd.s32 %s32, %s31
          %s1319 = smul.addr %s1318, 128
          %s1320 = scalar_lea.hbm %s6, %s1319
          %s1322 = sshll.u32 %s1311, 4
          %s1323 = int_to_ptr.vmem [resolvable:$true] %s1322
          %1325 = dma.vmem_to_hbm [thread:$0]  %s1323, 128, %s1320, %s1308
        $region68: #{tpu_custom_call.1} parent=43 // pred_fallthru
          _
      $region44: #{tpu_custom_call.1} parent=5 // pred_fallthru
        _
      %p1326 = scmp.le.s32.totalorder 2, %s22
      // Predicated region
      $region69: #{tpu_custom_call.1} parent=5 // pred_check
        %p1327 = pneg %p1326
      $region70: #{tpu_custom_call.1} parent=5 // pred_check_branch
        %1329 = sbr.rel (%p1327) target = $region72
      $region71: #{tpu_custom_call.1} parent=5 // pred_region
        %s1330 = ssub.s32 %s22, 2
        // Predicated region
        $region73: #{tpu_custom_call.1} parent=71 // pred_check
          %p1331 = pneg %p203
        $region74: #{tpu_custom_call.1} parent=71 // pred_check_branch
          %1333 = sbr.rel (%p1331) target = $region76
        $region75: #{tpu_custom_call.1} parent=71 // pred_region
          %s1334 = sand.u32 %s188, 1
          %s1335 = scalar_lea.sflag [#allocation4], %s1334
          %s1336 = sand.u32 %s188, 1
          %s1337 = smul.addr %s1336, 8
          %s1338 = scalar_lea.vmem [#allocation11], %s1337
          %1339 = dma.done %s1335, 128
        $region76: #{tpu_custom_call.1} parent=71 // pred_fallthru
          _
      $region72: #{tpu_custom_call.1} parent=5 // pred_fallthru
        _
    $region6: #{tpu_custom_call.1} parent=1 // loop_footer
      %s26 = sadd.s32 1, %s22
    $region7: #{tpu_custom_call.1} parent=1 // loop_footer_branch
      %21 = sbr.rel target = $region3
    $region8: #{tpu_custom_call.1} parent=1 // loop_exit
      _
    %1340 = vsyncpa [#allocation3], 1
    %s1341 = scalar_lea.sflag [#allocation3], 1
    %1342 = vsyncpa %s1341, 1
    %1343 = vsyncpa [#allocation6], 1
    %s1344 = scalar_lea.sflag [#allocation6], 1
    %1345 = vsyncpa %s1344, 1
    %1346 = vsyncpa [#allocation9], 1
    %1347 = vsyncpa [#allocation4], 1
    %s1348 = scalar_lea.sflag [#allocation4], 1
    %1349 = vsyncpa %s1348, 1

</llo_original>
